<compile_context>
chip_gen: v5e
topology: v5e:2x2
jax: 0.10.0
libtpu: 0.0.40
codegen_flags: <defaults>
</compile_context>

<pallas_src>
import functools

import jax
import jax.numpy as jnp
from jax import lax
from jax.experimental import pallas as pl
from jax.experimental.pallas import tpu as pltpu


def _ceil_to(x, m):
    return ((x + m - 1) // m) * m


def _sigmoid(x):
    # sigmoid(x) == 0.5 * (tanh(x/2) + 1): one EUP op instead of exp+recip.
    return 0.5 * (jnp.tanh(0.5 * x) + 1.0)


# ----------------------------------------------------------------------------
# Kernel
# ----------------------------------------------------------------------------
def _lstm_forward_kernel(x_ref, *refs, num_layers, hidden, o0, o1,
                         time_chunk, time_unroll, mxu_dtype):
    """Fused multi-layer LSTM + (Linear -> LayerNorm -> Softmax) x 2 heads.

    x_ref : (T, tb, D) time-major input tile (mxu_dtype).
    refs  : [w_ih_t (Din,4H), w_hh_t (H,4H), b (1,4H)] * num_layers   (inputs)
            w_heads_t (H,o0+o1), b_heads, g_heads, be_heads           (inputs)
            out (tb, o0+o1)                                           (output)
            proj_scr (Tc,tb,4H) f32, seq_scr (seq_T,tb,H) mxu_dtype   (scratch)
    Gate column order is [i | f | o | g] (pre-permuted at pack time).
    """
    H = hidden
    n_w = 3 * num_layers
    layer_refs = refs[:n_w]
    wht_ref, bh_ref, gh_ref, beh_ref = refs[n_w:n_w + 4]
    out_ref = refs[n_w + 4]
    proj_ref, seq_ref = refs[n_w + 5], refs[n_w + 6]

    T, tb, D = x_ref.shape
    Tc = time_chunk
    unroll = max(1, min(time_unroll, Tc))

    h_last = None
    for layer in range(num_layers):
        w_ih_t = layer_refs[3 * layer][...]        # (din, 4H)  mxu_dtype
        w_hh_t = layer_refs[3 * layer + 1][...]    # (H, 4H)    mxu_dtype
        b = layer_refs[3 * layer + 2][...]         # (1, 4H)    f32
        is_last = layer == num_layers - 1

        h = jnp.zeros((tb, H), jnp.float32)
        c = jnp.zeros((tb, H), jnp.float32)

        # Static time-chunk loop: one big MXU projection matmul per chunk,
        # O(Tc) VMEM for the projection scratch.
        for t0 in range(0, T, Tc):
            tc = min(Tc, T - t0)

            if layer == 0:
                xin = x_ref[pl.ds(t0, tc)].reshape(tc * tb, D)
            else:
                xin = seq_ref[pl.ds(t0, tc)].reshape(tc * tb, H)
            proj = jnp.dot(xin, w_ih_t, preferred_element_type=jnp.float32) + b
            proj_ref[pl.ds(0, tc)] = proj.reshape(tc, tb, 4 * H)
            # TODO(synk): double-buffer next chunk's projection vs recurrence.

            def one_step(tl, h, c, _w_hh_t=w_hh_t, _is_last=is_last, _t0=t0):
                # Single dependent matmul per timestep; rest is VPU/EUP work.
                gates = proj_ref[tl] + jnp.dot(
                    h.astype(mxu_dtype), _w_hh_t,
                    preferred_element_type=jnp.float32)
                # TODO(synk): hold W_hh MXU-weight-stationary across the time
                #             loop (pltpu.matmul_push_rhs / _acc_lhs / _pop).
                ifo = _sigmoid(gates[:, :3 * H])        # [i|f|o]: one EUP slab
                g = jnp.tanh(gates[:, 3 * H:])
                i_g = ifo[:, 0 * H:1 * H]
                f_g = ifo[:, 1 * H:2 * H]
                o_g = ifo[:, 2 * H:3 * H]
                c_new = f_g * c + i_g * g
                h_new = o_g * jnp.tanh(c_new)
                if not _is_last:
                    # Intermediate layers keep their sequence in VMEM scratch.
                    seq_ref[_t0 + tl] = h_new.astype(seq_ref.dtype)
                return h_new, c_new

            n_main = (tc // unroll) * unroll

            def body(k, carry, _one_step=one_step, _unroll=unroll):
                h, c = carry
                tl0 = k * _unroll
                for u in range(_unroll):   # manual unroll (scheduler visibility)
                    h, c = _one_step(tl0 + u, h, c)
                return (h, c)

            h, c = lax.fori_loop(0, tc // unroll, body, (h, c))
            for u in range(tc - n_main):   # static remainder steps
                h, c = one_step(n_main + u, h, c)

        h_last = h

    # ---- heads: one fused matmul, per-head LayerNorm + softmax, one store.
    y = jnp.dot(h_last.astype(mxu_dtype), wht_ref[...],
                preferred_element_type=jnp.float32) + bh_ref[...]
    g_all = gh_ref[...]
    be_all = beh_ref[...]

    def ln_softmax(v, g, be):
        m = jnp.mean(v, axis=-1, keepdims=True)
        var = jnp.mean((v - m) ** 2, axis=-1, keepdims=True)
        vn = (v - m) * lax.rsqrt(var + 1e-5) * g + be
        return jax.nn.softmax(vn, axis=-1)

    out0 = ln_softmax(y[:, :o0], g_all[:, :o0], be_all[:, :o0])
    out1 = ln_softmax(y[:, o0:o0 + o1], g_all[:, o0:o0 + o1],
                      be_all[:, o0:o0 + o1])
    out_ref[...] = jnp.concatenate([out0, out1], axis=-1)


# ----------------------------------------------------------------------------
# Wrapper
# ----------------------------------------------------------------------------
@functools.partial(jax.jit, static_argnames=("num_output", "batch_tile",
                                             "time_chunk", "time_unroll",
                                             "interpret"))
def lstm_forward(x, packed, *, num_output, batch_tile=128, time_chunk=128,
                 time_unroll=4, interpret=False):
    """x: (B, T, D) batch_first, like the PyTorch module. Returns (avpu, crt)."""
    B, T, D = x.shape
    lstm_p = packed["lstm"]
    L = len(lstm_p)
    Hp = lstm_p[0][1].shape[0]                 # w_hh_t is (Hp, 4Hp)
    mxu_dtype = lstm_p[0][1].dtype
    o0, o1 = num_output
    o_tot = o0 + o1

    # Batch tiling: sublane multiple for the MXU operand dtype; pad B up.
    # (On v7x choose batch_tile so B_pad // tb >= 2 -> both TCs get work.)
    sub = 16 if jnp.dtype(mxu_dtype).itemsize < 4 else 8
    tb = _ceil_to(min(batch_tile, _ceil_to(B, sub)), sub)
    B_pad = _ceil_to(B, tb)
    grid = (B_pad // tb,)

    x_tm = jnp.transpose(x, (1, 0, 2)).astype(mxu_dtype)     # (T, B, D) pre-cast
    if B_pad != B:
        x_tm = jnp.pad(x_tm, ((0, 0), (0, B_pad - B), (0, 0)))

    flat_weights = []
    for (w_ih_t, w_hh_t, b) in lstm_p:
        flat_weights += [w_ih_t, w_hh_t, b]
    flat_weights += [packed["w_heads_t"], packed["b_heads"],
                     packed["g_heads"], packed["be_heads"]]

    def _const_spec(a):
        nd = a.ndim
        idx_map = lambda i, _nd=nd: (0,) * _nd
        try:
            # Block index never changes across the grid -> single buffer
            # (avoids a duplicate VMEM copy of every weight).
            return pl.BlockSpec(a.shape, idx_map, pipeline_mode=pl.Buffered(1))
        except (TypeError, ValueError):
            return pl.BlockSpec(a.shape, idx_map)

    in_specs = [pl.BlockSpec((T, tb, D), lambda i: (0, i, 0))]
    in_specs += [_const_spec(a) for a in flat_weights]
    out_specs = pl.BlockSpec((tb, o_tot), lambda i: (i, 0))
    out_shape = jax.ShapeDtypeStruct((B_pad, o_tot), jnp.float32)

    Tc = max(1, min(time_chunk, T))
    seq_T = T if L > 1 else 1
    scratch_shapes = [pltpu.VMEM((Tc, tb, 4 * Hp), jnp.float32),   # gate proj
                      pltpu.VMEM((seq_T, tb, Hp), mxu_dtype)]      # inter-layer

    kernel = functools.partial(
        _lstm_forward_kernel, num_layers=L, hidden=Hp, o0=o0, o1=o1,
        time_chunk=Tc, time_unroll=time_unroll, mxu_dtype=mxu_dtype)

    out = pl.pallas_call(
        kernel,
        out_shape=out_shape,
        grid_spec=pltpu.PrefetchScalarGridSpec(
            num_scalar_prefetch=0,
            grid=grid,
            in_specs=in_specs,
            out_specs=out_specs,
            scratch_shapes=scratch_shapes),
        compiler_params=pltpu.CompilerParams(
            dimension_semantics=("parallel",),
            vmem_limit_bytes=64 * 1024 * 1024),
        interpret=interpret,
    )(x_tm, *flat_weights)

    return out[:B, :o0], out[:B, o0:o_tot]


# ----------------------------------------------------------------------------
# Parameter init (mirrors the PyTorch module, PyTorch gate order [i,f,g,o])
# and packing into the kernel layout (pre-transposed, gate order [i,f,o,g],
# hidden lane-padded, MXU-dtype pre-cast).
# ----------------------------------------------------------------------------
def _xavier_normal(key, shape):
    fan_out, fan_in = shape
    std = (2.0 / (fan_in + fan_out)) ** 0.5
    return std * jax.random.normal(key, shape, jnp.float32)


def init_torch_params(key, num_input, hidden_size, num_layers, num_output):
    keys = jax.random.split(key, 2 * num_layers + 2)
    lstm = []
    for l in range(num_layers):
        din = num_input if l == 0 else hidden_size
        lstm.append({
            "w_ih": _xavier_normal(keys[2 * l], (4 * hidden_size, din)),
            "w_hh": _xavier_normal(keys[2 * l + 1], (4 * hidden_size, hidden_size)),
            "b_ih": jnp.zeros((4 * hidden_size,), jnp.float32),
            "b_hh": jnp.zeros((4 * hidden_size,), jnp.float32),
        })
    o0, o1 = num_output
    heads = {
        "w_avpu": _xavier_normal(keys[-2], (o0, hidden_size)),
        "b_avpu": jnp.full((o0,), 0.01, jnp.float32),
        "w_crt": _xavier_normal(keys[-1], (o1, hidden_size)),
        "b_crt": jnp.full((o1,), 0.01, jnp.float32),
        "g0": jnp.ones((o0,), jnp.float32), "be0": jnp.zeros((o0,), jnp.float32),
        "g1": jnp.ones((o1,), jnp.float32), "be1": jnp.zeros((o1,), jnp.float32),
    }
    return {"lstm": lstm, "heads": heads, "hidden_size": hidden_size}


_TORCH_TO_KERNEL_GATES = (0, 1, 3, 2)   # PyTorch [i,f,g,o] -> kernel [i,f,o,g]


def pack_params(params, *, mxu_dtype=jnp.bfloat16, hidden_multiple=128):
    """Gate-reorder, lane-pad, pre-transpose and pre-cast weights for the kernel.

    Zero-padding the hidden dim is exact (padded units keep h == c == 0 and
    feed zero weight rows downstream).  Porting a trained PyTorch checkpoint
    only requires dropping its tensors into the init_torch_params dict layout.
    """
    H = params["hidden_size"]
    Hp = _ceil_to(H, hidden_multiple)

    def gate_reorder_pad(a):
        blocks = []
        for g in _TORCH_TO_KERNEL_GATES:
            blk = a[g * H:(g + 1) * H]
            pad = [(0, Hp - H)] + [(0, 0)] * (blk.ndim - 1)
            blocks.append(jnp.pad(blk, pad))
        return jnp.concatenate(blocks, axis=0)

    lstm = []
    for l, p in enumerate(params["lstm"]):
        w_ih = gate_reorder_pad(p["w_ih"])                       # (4Hp, din)
        if l > 0:                                                # pad input H->Hp
            w_ih = jnp.pad(w_ih, ((0, 0), (0, Hp - H)))
        w_hh = jnp.pad(gate_reorder_pad(p["w_hh"]), ((0, 0), (0, Hp - H)))
        b = gate_reorder_pad(p["b_ih"] + p["b_hh"]).reshape(1, 4 * Hp)
        lstm.append((jnp.asarray(w_ih.T, mxu_dtype),             # (din, 4Hp)
                     jnp.asarray(w_hh.T, mxu_dtype),             # (Hp, 4Hp)
                     b.astype(jnp.float32)))

    hp = params["heads"]
    w_heads = jnp.concatenate([hp["w_avpu"], hp["w_crt"]], axis=0)   # (o0+o1, H)
    w_heads = jnp.pad(w_heads, ((0, 0), (0, Hp - H)))
    return {
        "lstm": lstm,
        "w_heads_t": jnp.asarray(w_heads.T, mxu_dtype),              # (Hp, o0+o1)
        "b_heads": jnp.concatenate([hp["b_avpu"], hp["b_crt"]]).reshape(1, -1),
        "g_heads": jnp.concatenate([hp["g0"], hp["g1"]]).reshape(1, -1),
        "be_heads": jnp.concatenate([hp["be0"], hp["be1"]]).reshape(1, -1),
    }


# ----------------------------------------------------------------------------
# Pure-JAX reference (PyTorch semantics, unpadded, f32)
# ----------------------------------------------------------------------------
def _reference(x, params):
    H = params["hidden_size"]
    h_seq = jnp.transpose(x, (1, 0, 2))
    for p in params["lstm"]:
        T, B, _ = h_seq.shape
        b = p["b_ih"] + p["b_hh"]
        h = jnp.zeros((B, H), jnp.float32)
        c = jnp.zeros((B, H), jnp.float32)
        outs = []
        for t in range(T):
            gates = h_seq[t] @ p["w_ih"].T + h @ p["w_hh"].T + b
            i = jax.nn.sigmoid(gates[:, 0:H])
            f = jax.nn.sigmoid(gates[:, H:2 * H])
            g = jnp.tanh(gates[:, 2 * H:3 * H])
            o = jax.nn.sigmoid(gates[:, 3 * H:4 * H])
            c = f * c + i * g
            h = o * jnp.tanh(c)
            outs.append(h)
        h_seq = jnp.stack(outs, 0)
    last = h_seq[-1]
    hp = params["heads"]

    def head(w, bb, g, be):
        y = last @ w.T + bb
        m = y.mean(-1, keepdims=True)
        v = ((y - m) ** 2).mean(-1, keepdims=True)
        yn = (y - m) / jnp.sqrt(v + 1e-5) * g + be
        return jax.nn.softmax(yn, -1)

    return (head(hp["w_avpu"], hp["b_avpu"], hp["g0"], hp["be0"]),
            head(hp["w_crt"], hp["b_crt"], hp["g1"], hp["be1"]))


if __name__ == "__main__":
    B, T, D = 2, 8, 4
    H, L = 32, 2
    NUM_OUTPUT = (4, 5)

    key = jax.random.PRNGKey(0)
    pkey, xkey = jax.random.split(key)
    tparams = init_torch_params(pkey, D, H, L, NUM_OUTPUT)
    x = jax.random.normal(xkey, (B, T, D), jnp.float32)
    ref_avpu, ref_crt = _reference(x, tparams)

    # ---- f32-operand path: exact check against the pure-JAX reference.
    packed_f32 = pack_params(tparams, mxu_dtype=jnp.float32)
    out_avpu, out_crt = lstm_forward(x, packed_f32, num_output=NUM_OUTPUT)
    jax.block_until_ready((out_avpu, out_crt))
    assert out_avpu.shape == (B, NUM_OUTPUT[0])
    assert out_crt.shape == (B, NUM_OUTPUT[1])
    assert jnp.allclose(out_avpu, ref_avpu, atol=1e-5, rtol=1e-5)
    assert jnp.allclose(out_crt, ref_crt, atol=1e-5, rtol=1e-5)

    # ---- production bf16-operand path (default): sanity checks only.
    packed_bf16 = pack_params(tparams)      # mxu_dtype=bfloat16 default
    bf_avpu, bf_crt = lstm_forward(x, packed_bf16, num_output=NUM_OUTPUT)
    jax.block_until_ready((bf_avpu, bf_crt))
    assert bf_avpu.shape == (B, NUM_OUTPUT[0])
    assert bf_crt.shape == (B, NUM_OUTPUT[1])
    assert bool(jnp.all(jnp.isfinite(bf_avpu))) and bool(jnp.all(jnp.isfinite(bf_crt)))
    assert jnp.allclose(jnp.sum(bf_avpu, -1), 1.0, atol=1e-3)
    assert jnp.allclose(jnp.sum(bf_crt, -1), 1.0, atol=1e-3)

    print("KERNEL_OK")
</pallas_src>

<mosaic_0001>
module attributes {stable_mosaic.version = 11 : i64} {
  func.func @_lstm_forward_kernel(%arg0: i32, %arg1: memref<8x8x4xf32, #tpu.memory_space<vmem>>, %arg2: memref<4x512xf32, #tpu.memory_space<vmem>>, %arg3: memref<128x512xf32, #tpu.memory_space<vmem>>, %arg4: memref<1x512xf32, #tpu.memory_space<vmem>>, %arg5: memref<128x512xf32, #tpu.memory_space<vmem>>, %arg6: memref<128x512xf32, #tpu.memory_space<vmem>>, %arg7: memref<1x512xf32, #tpu.memory_space<vmem>>, %arg8: memref<128x9xf32, #tpu.memory_space<vmem>>, %arg9: memref<1x9xf32, #tpu.memory_space<vmem>>, %arg10: memref<1x9xf32, #tpu.memory_space<vmem>>, %arg11: memref<1x9xf32, #tpu.memory_space<vmem>>, %arg12: memref<8x9xf32, #tpu.memory_space<vmem>>, %arg13: memref<8x8x512xf32, #tpu.memory_space<vmem>>, %arg14: memref<8x8x128xf32, #tpu.memory_space<vmem>>) attributes {dimension_semantics = [#tpu.dimension_semantics<parallel>], iteration_bounds = array<i64: 1>, scalar_prefetch = 0 : i64, scratch_operands = 2 : i64, tpu.core_type = #tpu.core_type<tc>, window_params = [{transform_indices = @transform_0, window_bounds = array<i64: 8, 8, 4>}, {pipeline_mode = #tpu.pipeline_mode<synchronous>, transform_indices = @transform_1, window_bounds = array<i64: 4, 512>}, {pipeline_mode = #tpu.pipeline_mode<synchronous>, transform_indices = @transform_2, window_bounds = array<i64: 128, 512>}, {pipeline_mode = #tpu.pipeline_mode<synchronous>, transform_indices = @transform_3, window_bounds = array<i64: 1, 512>}, {pipeline_mode = #tpu.pipeline_mode<synchronous>, transform_indices = @transform_4, window_bounds = array<i64: 128, 512>}, {pipeline_mode = #tpu.pipeline_mode<synchronous>, transform_indices = @transform_5, window_bounds = array<i64: 128, 512>}, {pipeline_mode = #tpu.pipeline_mode<synchronous>, transform_indices = @transform_6, window_bounds = array<i64: 1, 512>}, {pipeline_mode = #tpu.pipeline_mode<synchronous>, transform_indices = @transform_7, window_bounds = array<i64: 128, 9>}, {pipeline_mode = #tpu.pipeline_mode<synchronous>, transform_indices = @transform_8, window_bounds = array<i64: 1, 9>}, {pipeline_mode = #tpu.pipeline_mode<synchronous>, transform_indices = @transform_9, window_bounds = array<i64: 1, 9>}, {pipeline_mode = #tpu.pipeline_mode<synchronous>, transform_indices = @transform_10, window_bounds = array<i64: 1, 9>}, {transform_indices = @transform_11, window_bounds = array<i64: 8, 9>}]} {
    %c0 = arith.constant 0 : index
    %c0_0 = arith.constant 0 : index
    %0 = vector.load %arg2[%c0, %c0_0] : memref<4x512xf32, #tpu.memory_space<vmem>>, vector<4x512xf32>
    %c0_1 = arith.constant 0 : index
    %c0_2 = arith.constant 0 : index
    %1 = vector.load %arg3[%c0_1, %c0_2] : memref<128x512xf32, #tpu.memory_space<vmem>>, vector<128x512xf32>
    %c0_3 = arith.constant 0 : index
    %c0_4 = arith.constant 0 : index
    %2 = vector.load %arg4[%c0_3, %c0_4] : memref<1x512xf32, #tpu.memory_space<vmem>>, vector<1x512xf32>
    %cst = arith.constant 0.000000e+00 : f32
    %3 = vector.broadcast %cst : f32 to vector<8x128xf32>
    %cst_5 = arith.constant 0.000000e+00 : f32
    %4 = vector.broadcast %cst_5 : f32 to vector<8x128xf32>
    %c0_6 = arith.constant 0 : index
    %c0_7 = arith.constant 0 : index
    %c0_8 = arith.constant 0 : index
    %5 = vector.load %arg1[%c0_6, %c0_7, %c0_8] : memref<8x8x4xf32, #tpu.memory_space<vmem>>, vector<8x8x4xf32>
    %6 = vector.shape_cast %5 : vector<8x8x4xf32> to vector<64x4xf32>
    %cst_9 = arith.constant dense<0.000000e+00> : vector<64x512xf32>
    %7 = tpu.matmul %6, %0, %cst_9 {dimension_numbers = #tpu.dot_dimension_numbers<[1], [0], [0], [1], [0, 0, 1, 1], [], []>} : vector<64x4xf32>, vector<4x512xf32>, vector<64x512xf32> -> vector<64x512xf32>
    %8 = vector.broadcast %2 : vector<1x512xf32> to vector<64x512xf32>
    %9 = arith.addf %7, %8 : vector<64x512xf32>
    %10 = vector.shape_cast %9 : vector<64x512xf32> to vector<8x8x512xf32>
    %c0_10 = arith.constant 0 : index
    %c0_11 = arith.constant 0 : index
    %c0_12 = arith.constant 0 : index
    %11 = vector.load %arg13[%c0_10, %c0_11, %c0_12] : memref<8x8x512xf32, #tpu.memory_space<vmem>>, vector<8x8x512xf32>
    tpu.vector_store %arg13[%c0_10, %c0_11, %c0_12], %10 {strides = array<i32>} : memref<8x8x512xf32, #tpu.memory_space<vmem>>, vector<8x8x512xf32>,
    %c0_i32 = arith.constant 0 : i32
    %c2_i32 = arith.constant 2 : i32
    %12 = arith.addi %c0_i32, %c2_i32 : i32
    %c1_i32 = arith.constant 1 : i32
    %13:2 = scf.for %arg15 = %c0_i32 to %12 step %c1_i32 iter_args(%arg16 = %3, %arg17 = %4) -> (vector<8x128xf32>, vector<8x128xf32>)  : i32 {
      %c4_i32 = arith.constant 4 : i32
      %109 = arith.muli %arg15, %c4_i32 : i32
      %c0_i32_60 = arith.constant 0 : i32
      %110 = arith.addi %109, %c0_i32_60 : i32
      %111 = arith.index_cast %110 : i32 to index
      %c0_61 = arith.constant 0 : index
      %c0_62 = arith.constant 0 : index
      %112 = vector.load %arg13[%111, %c0_61, %c0_62] : memref<8x8x512xf32, #tpu.memory_space<vmem>>, vector<1x8x512xf32>
      %113 = vector.shape_cast %112 : vector<1x8x512xf32> to vector<8x512xf32>
      %cst_63 = arith.constant dense<0.000000e+00> : vector<8x512xf32>
      %114 = tpu.matmul %arg16, %1, %cst_63 {dimension_numbers = #tpu.dot_dimension_numbers<[1], [0], [0], [1], [0, 0, 1, 1], [], []>} : vector<8x128xf32>, vector<128x512xf32>, vector<8x512xf32> -> vector<8x512xf32>
      %115 = arith.addf %113, %114 : vector<8x512xf32>
      %116 = vector.extract_strided_slice %115 {offsets = [0, 0], sizes = [8, 384], strides = [1, 1]} : vector<8x512xf32> to vector<8x384xf32>
      %cst_64 = arith.constant 5.000000e-01 : f32
      %117 = vector.broadcast %cst_64 : f32 to vector<8x384xf32>
      %118 = arith.mulf %117, %116 : vector<8x384xf32>
      %119 = math.tanh %118 : vector<8x384xf32>
      %cst_65 = arith.constant 1.000000e+00 : f32
      %120 = vector.broadcast %cst_65 : f32 to vector<8x384xf32>
      %121 = arith.addf %119, %120 : vector<8x384xf32>
      %cst_66 = arith.constant 5.000000e-01 : f32
      %122 = vector.broadcast %cst_66 : f32 to vector<8x384xf32>
      %123 = arith.mulf %122, %121 : vector<8x384xf32>
      %124 = vector.extract_strided_slice %115 {offsets = [0, 384], sizes = [8, 128], strides = [1, 1]} : vector<8x512xf32> to vector<8x128xf32>
      %125 = math.tanh %124 : vector<8x128xf32>
      %126 = vector.extract_strided_slice %123 {offsets = [0, 0], sizes = [8, 128], strides = [1, 1]} : vector<8x384xf32> to vector<8x128xf32>
      %127 = vector.extract_strided_slice %123 {offsets = [0, 128], sizes = [8, 128], strides = [1, 1]} : vector<8x384xf32> to vector<8x128xf32>
      %128 = vector.extract_strided_slice %123 {offsets = [0, 256], sizes = [8, 128], strides = [1, 1]} : vector<8x384xf32> to vector<8x128xf32>
      %129 = arith.mulf %127, %arg17 : vector<8x128xf32>
      %130 = arith.mulf %126, %125 : vector<8x128xf32>
      %131 = arith.addf %129, %130 : vector<8x128xf32>
      %132 = math.tanh %131 : vector<8x128xf32>
      %133 = arith.mulf %128, %132 : vector<8x128xf32>
      %c0_i32_67 = arith.constant 0 : i32
      %134 = arith.addi %c0_i32_67, %110 : i32
      %135 = arith.index_cast %134 : i32 to index
      %c0_68 = arith.constant 0 : index
      %c0_69 = arith.constant 0 : index
      %136 = vector.load %arg14[%135, %c0_68, %c0_69] : memref<8x8x128xf32, #tpu.memory_space<vmem>>, vector<1x8x128xf32>
      %137 = vector.shape_cast %136 : vector<1x8x128xf32> to vector<8x128xf32>
      %138 = vector.shape_cast %133 : vector<8x128xf32> to vector<1x8x128xf32>
      tpu.vector_store %arg14[%135, %c0_68, %c0_69], %138 {strides = array<i32>} : memref<8x8x128xf32, #tpu.memory_space<vmem>>, vector<1x8x128xf32>,
      %c1_i32_70 = arith.constant 1 : i32
      %139 = arith.addi %109, %c1_i32_70 : i32
      %140 = arith.index_cast %139 : i32 to index
      %c0_71 = arith.constant 0 : index
      %c0_72 = arith.constant 0 : index
      %141 = vector.load %arg13[%140, %c0_71, %c0_72] : memref<8x8x512xf32, #tpu.memory_space<vmem>>, vector<1x8x512xf32>
      %142 = vector.shape_cast %141 : vector<1x8x512xf32> to vector<8x512xf32>
      %cst_73 = arith.constant dense<0.000000e+00> : vector<8x512xf32>
      %143 = tpu.matmul %133, %1, %cst_73 {dimension_numbers = #tpu.dot_dimension_numbers<[1], [0], [0], [1], [0, 0, 1, 1], [], []>} : vector<8x128xf32>, vector<128x512xf32>, vector<8x512xf32> -> vector<8x512xf32>
      %144 = arith.addf %142, %143 : vector<8x512xf32>
      %145 = vector.extract_strided_slice %144 {offsets = [0, 0], sizes = [8, 384], strides = [1, 1]} : vector<8x512xf32> to vector<8x384xf32>
      %cst_74 = arith.constant 5.000000e-01 : f32
      %146 = vector.broadcast %cst_74 : f32 to vector<8x384xf32>
      %147 = arith.mulf %146, %145 : vector<8x384xf32>
      %148 = math.tanh %147 : vector<8x384xf32>
      %cst_75 = arith.constant 1.000000e+00 : f32
      %149 = vector.broadcast %cst_75 : f32 to vector<8x384xf32>
      %150 = arith.addf %148, %149 : vector<8x384xf32>
      %cst_76 = arith.constant 5.000000e-01 : f32
      %151 = vector.broadcast %cst_76 : f32 to vector<8x384xf32>
      %152 = arith.mulf %151, %150 : vector<8x384xf32>
      %153 = vector.extract_strided_slice %144 {offsets = [0, 384], sizes = [8, 128], strides = [1, 1]} : vector<8x512xf32> to vector<8x128xf32>
      %154 = math.tanh %153 : vector<8x128xf32>
      %155 = vector.extract_strided_slice %152 {offsets = [0, 0], sizes = [8, 128], strides = [1, 1]} : vector<8x384xf32> to vector<8x128xf32>
      %156 = vector.extract_strided_slice %152 {offsets = [0, 128], sizes = [8, 128], strides = [1, 1]} : vector<8x384xf32> to vector<8x128xf32>
      %157 = vector.extract_strided_slice %152 {offsets = [0, 256], sizes = [8, 128], strides = [1, 1]} : vector<8x384xf32> to vector<8x128xf32>
      %158 = arith.mulf %156, %131 : vector<8x128xf32>
      %159 = arith.mulf %155, %154 : vector<8x128xf32>
      %160 = arith.addf %158, %159 : vector<8x128xf32>
      %161 = math.tanh %160 : vector<8x128xf32>
      %162 = arith.mulf %157, %161 : vector<8x128xf32>
      %c0_i32_77 = arith.constant 0 : i32
      %163 = arith.addi %c0_i32_77, %139 : i32
      %164 = arith.index_cast %163 : i32 to index
      %c0_78 = arith.constant 0 : index
      %c0_79 = arith.constant 0 : index
      %165 = vector.load %arg14[%164, %c0_78, %c0_79] : memref<8x8x128xf32, #tpu.memory_space<vmem>>, vector<1x8x128xf32>
      %166 = vector.shape_cast %165 : vector<1x8x128xf32> to vector<8x128xf32>
      %167 = vector.shape_cast %162 : vector<8x128xf32> to vector<1x8x128xf32>
      tpu.vector_store %arg14[%164, %c0_78, %c0_79], %167 {strides = array<i32>} : memref<8x8x128xf32, #tpu.memory_space<vmem>>, vector<1x8x128xf32>,
      %c2_i32_80 = arith.constant 2 : i32
      %168 = arith.addi %109, %c2_i32_80 : i32
      %169 = arith.index_cast %168 : i32 to index
      %c0_81 = arith.constant 0 : index
      %c0_82 = arith.constant 0 : index
      %170 = vector.load %arg13[%169, %c0_81, %c0_82] : memref<8x8x512xf32, #tpu.memory_space<vmem>>, vector<1x8x512xf32>
      %171 = vector.shape_cast %170 : vector<1x8x512xf32> to vector<8x512xf32>
      %cst_83 = arith.constant dense<0.000000e+00> : vector<8x512xf32>
      %172 = tpu.matmul %162, %1, %cst_83 {dimension_numbers = #tpu.dot_dimension_numbers<[1], [0], [0], [1], [0, 0, 1, 1], [], []>} : vector<8x128xf32>, vector<128x512xf32>, vector<8x512xf32> -> vector<8x512xf32>
      %173 = arith.addf %171, %172 : vector<8x512xf32>
      %174 = vector.extract_strided_slice %173 {offsets = [0, 0], sizes = [8, 384], strides = [1, 1]} : vector<8x512xf32> to vector<8x384xf32>
      %cst_84 = arith.constant 5.000000e-01 : f32
      %175 = vector.broadcast %cst_84 : f32 to vector<8x384xf32>
      %176 = arith.mulf %175, %174 : vector<8x384xf32>
      %177 = math.tanh %176 : vector<8x384xf32>
      %cst_85 = arith.constant 1.000000e+00 : f32
      %178 = vector.broadcast %cst_85 : f32 to vector<8x384xf32>
      %179 = arith.addf %177, %178 : vector<8x384xf32>
      %cst_86 = arith.constant 5.000000e-01 : f32
      %180 = vector.broadcast %cst_86 : f32 to vector<8x384xf32>
      %181 = arith.mulf %180, %179 : vector<8x384xf32>
      %182 = vector.extract_strided_slice %173 {offsets = [0, 384], sizes = [8, 128], strides = [1, 1]} : vector<8x512xf32> to vector<8x128xf32>
      %183 = math.tanh %182 : vector<8x128xf32>
      %184 = vector.extract_strided_slice %181 {offsets = [0, 0], sizes = [8, 128], strides = [1, 1]} : vector<8x384xf32> to vector<8x128xf32>
      %185 = vector.extract_strided_slice %181 {offsets = [0, 128], sizes = [8, 128], strides = [1, 1]} : vector<8x384xf32> to vector<8x128xf32>
      %186 = vector.extract_strided_slice %181 {offsets = [0, 256], sizes = [8, 128], strides = [1, 1]} : vector<8x384xf32> to vector<8x128xf32>
      %187 = arith.mulf %185, %160 : vector<8x128xf32>
      %188 = arith.mulf %184, %183 : vector<8x128xf32>
      %189 = arith.addf %187, %188 : vector<8x128xf32>
      %190 = math.tanh %189 : vector<8x128xf32>
      %191 = arith.mulf %186, %190 : vector<8x128xf32>
      %c0_i32_87 = arith.constant 0 : i32
      %192 = arith.addi %c0_i32_87, %168 : i32
      %193 = arith.index_cast %192 : i32 to index
      %c0_88 = arith.constant 0 : index
      %c0_89 = arith.constant 0 : index
      %194 = vector.load %arg14[%193, %c0_88, %c0_89] : memref<8x8x128xf32, #tpu.memory_space<vmem>>, vector<1x8x128xf32>
      %195 = vector.shape_cast %194 : vector<1x8x128xf32> to vector<8x128xf32>
      %196 = vector.shape_cast %191 : vector<8x128xf32> to vector<1x8x128xf32>
      tpu.vector_store %arg14[%193, %c0_88, %c0_89], %196 {strides = array<i32>} : memref<8x8x128xf32, #tpu.memory_space<vmem>>, vector<1x8x128xf32>,
      %c3_i32 = arith.constant 3 : i32
      %197 = arith.addi %109, %c3_i32 : i32
      %198 = arith.index_cast %197 : i32 to index
      %c0_90 = arith.constant 0 : index
      %c0_91 = arith.constant 0 : index
      %199 = vector.load %arg13[%198, %c0_90, %c0_91] : memref<8x8x512xf32, #tpu.memory_space<vmem>>, vector<1x8x512xf32>
      %200 = vector.shape_cast %199 : vector<1x8x512xf32> to vector<8x512xf32>
      %cst_92 = arith.constant dense<0.000000e+00> : vector<8x512xf32>
      %201 = tpu.matmul %191, %1, %cst_92 {dimension_numbers = #tpu.dot_dimension_numbers<[1], [0], [0], [1], [0, 0, 1, 1], [], []>} : vector<8x128xf32>, vector<128x512xf32>, vector<8x512xf32> -> vector<8x512xf32>
      %202 = arith.addf %200, %201 : vector<8x512xf32>
      %203 = vector.extract_strided_slice %202 {offsets = [0, 0], sizes = [8, 384], strides = [1, 1]} : vector<8x512xf32> to vector<8x384xf32>
      %cst_93 = arith.constant 5.000000e-01 : f32
      %204 = vector.broadcast %cst_93 : f32 to vector<8x384xf32>
      %205 = arith.mulf %204, %203 : vector<8x384xf32>
      %206 = math.tanh %205 : vector<8x384xf32>
      %cst_94 = arith.constant 1.000000e+00 : f32
      %207 = vector.broadcast %cst_94 : f32 to vector<8x384xf32>
      %208 = arith.addf %206, %207 : vector<8x384xf32>
      %cst_95 = arith.constant 5.000000e-01 : f32
      %209 = vector.broadcast %cst_95 : f32 to vector<8x384xf32>
      %210 = arith.mulf %209, %208 : vector<8x384xf32>
      %211 = vector.extract_strided_slice %202 {offsets = [0, 384], sizes = [8, 128], strides = [1, 1]} : vector<8x512xf32> to vector<8x128xf32>
      %212 = math.tanh %211 : vector<8x128xf32>
      %213 = vector.extract_strided_slice %210 {offsets = [0, 0], sizes = [8, 128], strides = [1, 1]} : vector<8x384xf32> to vector<8x128xf32>
      %214 = vector.extract_strided_slice %210 {offsets = [0, 128], sizes = [8, 128], strides = [1, 1]} : vector<8x384xf32> to vector<8x128xf32>
      %215 = vector.extract_strided_slice %210 {offsets = [0, 256], sizes = [8, 128], strides = [1, 1]} : vector<8x384xf32> to vector<8x128xf32>
      %216 = arith.mulf %214, %189 : vector<8x128xf32>
      %217 = arith.mulf %213, %212 : vector<8x128xf32>
      %218 = arith.addf %216, %217 : vector<8x128xf32>
      %219 = math.tanh %218 : vector<8x128xf32>
      %220 = arith.mulf %215, %219 : vector<8x128xf32>
      %c0_i32_96 = arith.constant 0 : i32
      %221 = arith.addi %c0_i32_96, %197 : i32
      %222 = arith.index_cast %221 : i32 to index
      %c0_97 = arith.constant 0 : index
      %c0_98 = arith.constant 0 : index
      %223 = vector.load %arg14[%222, %c0_97, %c0_98] : memref<8x8x128xf32, #tpu.memory_space<vmem>>, vector<1x8x128xf32>
      %224 = vector.shape_cast %223 : vector<1x8x128xf32> to vector<8x128xf32>
      %225 = vector.shape_cast %220 : vector<8x128xf32> to vector<1x8x128xf32>
      tpu.vector_store %arg14[%222, %c0_97, %c0_98], %225 {strides = array<i32>} : memref<8x8x128xf32, #tpu.memory_space<vmem>>, vector<1x8x128xf32>,
      scf.yield %220, %218 : vector<8x128xf32>, vector<8x128xf32>
    }
    %c2_i32_13 = arith.constant 2 : i32
    %c0_14 = arith.constant 0 : index
    %c0_15 = arith.constant 0 : index
    %14 = vector.load %arg5[%c0_14, %c0_15] : memref<128x512xf32, #tpu.memory_space<vmem>>, vector<128x512xf32>
    %c0_16 = arith.constant 0 : index
    %c0_17 = arith.constant 0 : index
    %15 = vector.load %arg6[%c0_16, %c0_17] : memref<128x512xf32, #tpu.memory_space<vmem>>, vector<128x512xf32>
    %c0_18 = arith.constant 0 : index
    %c0_19 = arith.constant 0 : index
    %16 = vector.load %arg7[%c0_18, %c0_19] : memref<1x512xf32, #tpu.memory_space<vmem>>, vector<1x512xf32>
    %cst_20 = arith.constant 0.000000e+00 : f32
    %17 = vector.broadcast %cst_20 : f32 to vector<8x128xf32>
    %cst_21 = arith.constant 0.000000e+00 : f32
    %18 = vector.broadcast %cst_21 : f32 to vector<8x128xf32>
    %c0_22 = arith.constant 0 : index
    %c0_23 = arith.constant 0 : index
    %c0_24 = arith.constant 0 : index
    %19 = vector.load %arg14[%c0_22, %c0_23, %c0_24] : memref<8x8x128xf32, #tpu.memory_space<vmem>>, vector<8x8x128xf32>
    %20 = vector.shape_cast %19 : vector<8x8x128xf32> to vector<64x128xf32>
    %cst_25 = arith.constant dense<0.000000e+00> : vector<64x512xf32>
    %21 = tpu.matmul %20, %14, %cst_25 {dimension_numbers = #tpu.dot_dimension_numbers<[1], [0], [0], [1], [0, 0, 1, 1], [], []>} : vector<64x128xf32>, vector<128x512xf32>, vector<64x512xf32> -> vector<64x512xf32>
    %22 = vector.broadcast %16 : vector<1x512xf32> to vector<64x512xf32>
    %23 = arith.addf %21, %22 : vector<64x512xf32>
    %24 = vector.shape_cast %23 : vector<64x512xf32> to vector<8x8x512xf32>
    %c0_26 = arith.constant 0 : index
    %c0_27 = arith.constant 0 : index
    %c0_28 = arith.constant 0 : index
    %25 = vector.load %arg13[%c0_26, %c0_27, %c0_28] : memref<8x8x512xf32, #tpu.memory_space<vmem>>, vector<8x8x512xf32>
    tpu.vector_store %arg13[%c0_26, %c0_27, %c0_28], %24 {strides = array<i32>} : memref<8x8x512xf32, #tpu.memory_space<vmem>>, vector<8x8x512xf32>,
    %c0_i32_29 = arith.constant 0 : i32
    %c2_i32_30 = arith.constant 2 : i32
    %26 = arith.addi %c0_i32_29, %c2_i32_30 : i32
    %c1_i32_31 = arith.constant 1 : i32
    %27:2 = scf.for %arg15 = %c0_i32_29 to %26 step %c1_i32_31 iter_args(%arg16 = %17, %arg17 = %18) -> (vector<8x128xf32>, vector<8x128xf32>)  : i32 {
      %c4_i32 = arith.constant 4 : i32
      %109 = arith.muli %arg15, %c4_i32 : i32
      %c0_i32_60 = arith.constant 0 : i32
      %110 = arith.addi %109, %c0_i32_60 : i32
      %111 = arith.index_cast %110 : i32 to index
      %c0_61 = arith.constant 0 : index
      %c0_62 = arith.constant 0 : index
      %112 = vector.load %arg13[%111, %c0_61, %c0_62] : memref<8x8x512xf32, #tpu.memory_space<vmem>>, vector<1x8x512xf32>
      %113 = vector.shape_cast %112 : vector<1x8x512xf32> to vector<8x512xf32>
      %cst_63 = arith.constant dense<0.000000e+00> : vector<8x512xf32>
      %114 = tpu.matmul %arg16, %15, %cst_63 {dimension_numbers = #tpu.dot_dimension_numbers<[1], [0], [0], [1], [0, 0, 1, 1], [], []>} : vector<8x128xf32>, vector<128x512xf32>, vector<8x512xf32> -> vector<8x512xf32>
      %115 = arith.addf %113, %114 : vector<8x512xf32>
      %116 = vector.extract_strided_slice %115 {offsets = [0, 0], sizes = [8, 384], strides = [1, 1]} : vector<8x512xf32> to vector<8x384xf32>
      %cst_64 = arith.constant 5.000000e-01 : f32
      %117 = vector.broadcast %cst_64 : f32 to vector<8x384xf32>
      %118 = arith.mulf %117, %116 : vector<8x384xf32>
      %119 = math.tanh %118 : vector<8x384xf32>
      %cst_65 = arith.constant 1.000000e+00 : f32
      %120 = vector.broadcast %cst_65 : f32 to vector<8x384xf32>
      %121 = arith.addf %119, %120 : vector<8x384xf32>
      %cst_66 = arith.constant 5.000000e-01 : f32
      %122 = vector.broadcast %cst_66 : f32 to vector<8x384xf32>
      %123 = arith.mulf %122, %121 : vector<8x384xf32>
      %124 = vector.extract_strided_slice %115 {offsets = [0, 384], sizes = [8, 128], strides = [1, 1]} : vector<8x512xf32> to vector<8x128xf32>
      %125 = math.tanh %124 : vector<8x128xf32>
      %126 = vector.extract_strided_slice %123 {offsets = [0, 0], sizes = [8, 128], strides = [1, 1]} : vector<8x384xf32> to vector<8x128xf32>
      %127 = vector.extract_strided_slice %123 {offsets = [0, 128], sizes = [8, 128], strides = [1, 1]} : vector<8x384xf32> to vector<8x128xf32>
      %128 = vector.extract_strided_slice %123 {offsets = [0, 256], sizes = [8, 128], strides = [1, 1]} : vector<8x384xf32> to vector<8x128xf32>
      %129 = arith.mulf %127, %arg17 : vector<8x128xf32>
      %130 = arith.mulf %126, %125 : vector<8x128xf32>
      %131 = arith.addf %129, %130 : vector<8x128xf32>
      %132 = math.tanh %131 : vector<8x128xf32>
      %133 = arith.mulf %128, %132 : vector<8x128xf32>
      %c1_i32_67 = arith.constant 1 : i32
      %134 = arith.addi %109, %c1_i32_67 : i32
      %135 = arith.index_cast %134 : i32 to index
      %c0_68 = arith.constant 0 : index
      %c0_69 = arith.constant 0 : index
      %136 = vector.load %arg13[%135, %c0_68, %c0_69] : memref<8x8x512xf32, #tpu.memory_space<vmem>>, vector<1x8x512xf32>
      %137 = vector.shape_cast %136 : vector<1x8x512xf32> to vector<8x512xf32>
      %cst_70 = arith.constant dense<0.000000e+00> : vector<8x512xf32>
      %138 = tpu.matmul %133, %15, %cst_70 {dimension_numbers = #tpu.dot_dimension_numbers<[1], [0], [0], [1], [0, 0, 1, 1], [], []>} : vector<8x128xf32>, vector<128x512xf32>, vector<8x512xf32> -> vector<8x512xf32>
      %139 = arith.addf %137, %138 : vector<8x512xf32>
      %140 = vector.extract_strided_slice %139 {offsets = [0, 0], sizes = [8, 384], strides = [1, 1]} : vector<8x512xf32> to vector<8x384xf32>
      %cst_71 = arith.constant 5.000000e-01 : f32
      %141 = vector.broadcast %cst_71 : f32 to vector<8x384xf32>
      %142 = arith.mulf %141, %140 : vector<8x384xf32>
      %143 = math.tanh %142 : vector<8x384xf32>
      %cst_72 = arith.constant 1.000000e+00 : f32
      %144 = vector.broadcast %cst_72 : f32 to vector<8x384xf32>
      %145 = arith.addf %143, %144 : vector<8x384xf32>
      %cst_73 = arith.constant 5.000000e-01 : f32
      %146 = vector.broadcast %cst_73 : f32 to vector<8x384xf32>
      %147 = arith.mulf %146, %145 : vector<8x384xf32>
      %148 = vector.extract_strided_slice %139 {offsets = [0, 384], sizes = [8, 128], strides = [1, 1]} : vector<8x512xf32> to vector<8x128xf32>
      %149 = math.tanh %148 : vector<8x128xf32>
      %150 = vector.extract_strided_slice %147 {offsets = [0, 0], sizes = [8, 128], strides = [1, 1]} : vector<8x384xf32> to vector<8x128xf32>
      %151 = vector.extract_strided_slice %147 {offsets = [0, 128], sizes = [8, 128], strides = [1, 1]} : vector<8x384xf32> to vector<8x128xf32>
      %152 = vector.extract_strided_slice %147 {offsets = [0, 256], sizes = [8, 128], strides = [1, 1]} : vector<8x384xf32> to vector<8x128xf32>
      %153 = arith.mulf %151, %131 : vector<8x128xf32>
      %154 = arith.mulf %150, %149 : vector<8x128xf32>
      %155 = arith.addf %153, %154 : vector<8x128xf32>
      %156 = math.tanh %155 : vector<8x128xf32>
      %157 = arith.mulf %152, %156 : vector<8x128xf32>
      %c2_i32_74 = arith.constant 2 : i32
      %158 = arith.addi %109, %c2_i32_74 : i32
      %159 = arith.index_cast %158 : i32 to index
      %c0_75 = arith.constant 0 : index
      %c0_76 = arith.constant 0 : index
      %160 = vector.load %arg13[%159, %c0_75, %c0_76] : memref<8x8x512xf32, #tpu.memory_space<vmem>>, vector<1x8x512xf32>
      %161 = vector.shape_cast %160 : vector<1x8x512xf32> to vector<8x512xf32>
      %cst_77 = arith.constant dense<0.000000e+00> : vector<8x512xf32>
      %162 = tpu.matmul %157, %15, %cst_77 {dimension_numbers = #tpu.dot_dimension_numbers<[1], [0], [0], [1], [0, 0, 1, 1], [], []>} : vector<8x128xf32>, vector<128x512xf32>, vector<8x512xf32> -> vector<8x512xf32>
      %163 = arith.addf %161, %162 : vector<8x512xf32>
      %164 = vector.extract_strided_slice %163 {offsets = [0, 0], sizes = [8, 384], strides = [1, 1]} : vector<8x512xf32> to vector<8x384xf32>
      %cst_78 = arith.constant 5.000000e-01 : f32
      %165 = vector.broadcast %cst_78 : f32 to vector<8x384xf32>
      %166 = arith.mulf %165, %164 : vector<8x384xf32>
      %167 = math.tanh %166 : vector<8x384xf32>
      %cst_79 = arith.constant 1.000000e+00 : f32
      %168 = vector.broadcast %cst_79 : f32 to vector<8x384xf32>
      %169 = arith.addf %167, %168 : vector<8x384xf32>
      %cst_80 = arith.constant 5.000000e-01 : f32
      %170 = vector.broadcast %cst_80 : f32 to vector<8x384xf32>
      %171 = arith.mulf %170, %169 : vector<8x384xf32>
      %172 = vector.extract_strided_slice %163 {offsets = [0, 384], sizes = [8, 128], strides = [1, 1]} : vector<8x512xf32> to vector<8x128xf32>
      %173 = math.tanh %172 : vector<8x128xf32>
      %174 = vector.extract_strided_slice %171 {offsets = [0, 0], sizes = [8, 128], strides = [1, 1]} : vector<8x384xf32> to vector<8x128xf32>
      %175 = vector.extract_strided_slice %171 {offsets = [0, 128], sizes = [8, 128], strides = [1, 1]} : vector<8x384xf32> to vector<8x128xf32>
      %176 = vector.extract_strided_slice %171 {offsets = [0, 256], sizes = [8, 128], strides = [1, 1]} : vector<8x384xf32> to vector<8x128xf32>
      %177 = arith.mulf %175, %155 : vector<8x128xf32>
      %178 = arith.mulf %174, %173 : vector<8x128xf32>
      %179 = arith.addf %177, %178 : vector<8x128xf32>
      %180 = math.tanh %179 : vector<8x128xf32>
      %181 = arith.mulf %176, %180 : vector<8x128xf32>
      %c3_i32 = arith.constant 3 : i32
      %182 = arith.addi %109, %c3_i32 : i32
      %183 = arith.index_cast %182 : i32 to index
      %c0_81 = arith.constant 0 : index
      %c0_82 = arith.constant 0 : index
      %184 = vector.load %arg13[%183, %c0_81, %c0_82] : memref<8x8x512xf32, #tpu.memory_space<vmem>>, vector<1x8x512xf32>
      %185 = vector.shape_cast %184 : vector<1x8x512xf32> to vector<8x512xf32>
      %cst_83 = arith.constant dense<0.000000e+00> : vector<8x512xf32>
      %186 = tpu.matmul %181, %15, %cst_83 {dimension_numbers = #tpu.dot_dimension_numbers<[1], [0], [0], [1], [0, 0, 1, 1], [], []>} : vector<8x128xf32>, vector<128x512xf32>, vector<8x512xf32> -> vector<8x512xf32>
      %187 = arith.addf %185, %186 : vector<8x512xf32>
      %188 = vector.extract_strided_slice %187 {offsets = [0, 0], sizes = [8, 384], strides = [1, 1]} : vector<8x512xf32> to vector<8x384xf32>
      %cst_84 = arith.constant 5.000000e-01 : f32
      %189 = vector.broadcast %cst_84 : f32 to vector<8x384xf32>
      %190 = arith.mulf %189, %188 : vector<8x384xf32>
      %191 = math.tanh %190 : vector<8x384xf32>
      %cst_85 = arith.constant 1.000000e+00 : f32
      %192 = vector.broadcast %cst_85 : f32 to vector<8x384xf32>
      %193 = arith.addf %191, %192 : vector<8x384xf32>
      %cst_86 = arith.constant 5.000000e-01 : f32
      %194 = vector.broadcast %cst_86 : f32 to vector<8x384xf32>
      %195 = arith.mulf %194, %193 : vector<8x384xf32>
      %196 = vector.extract_strided_slice %187 {offsets = [0, 384], sizes = [8, 128], strides = [1, 1]} : vector<8x512xf32> to vector<8x128xf32>
      %197 = math.tanh %196 : vector<8x128xf32>
      %198 = vector.extract_strided_slice %195 {offsets = [0, 0], sizes = [8, 128], strides = [1, 1]} : vector<8x384xf32> to vector<8x128xf32>
      %199 = vector.extract_strided_slice %195 {offsets = [0, 128], sizes = [8, 128], strides = [1, 1]} : vector<8x384xf32> to vector<8x128xf32>
      %200 = vector.extract_strided_slice %195 {offsets = [0, 256], sizes = [8, 128], strides = [1, 1]} : vector<8x384xf32> to vector<8x128xf32>
      %201 = arith.mulf %199, %179 : vector<8x128xf32>
      %202 = arith.mulf %198, %197 : vector<8x128xf32>
      %203 = arith.addf %201, %202 : vector<8x128xf32>
      %204 = math.tanh %203 : vector<8x128xf32>
      %205 = arith.mulf %200, %204 : vector<8x128xf32>
      scf.yield %205, %203 : vector<8x128xf32>, vector<8x128xf32>
    }
    %c2_i32_32 = arith.constant 2 : i32
    %c0_33 = arith.constant 0 : index
    %c0_34 = arith.constant 0 : index
    %28 = vector.load %arg8[%c0_33, %c0_34] : memref<128x9xf32, #tpu.memory_space<vmem>>, vector<128x9xf32>
    %cst_35 = arith.constant dense<0.000000e+00> : vector<8x9xf32>
    %29 = tpu.matmul %27#0, %28, %cst_35 {dimension_numbers = #tpu.dot_dimension_numbers<[1], [0], [0], [1], [0, 0, 1, 1], [], []>} : vector<8x128xf32>, vector<128x9xf32>, vector<8x9xf32> -> vector<8x9xf32>
    %c0_36 = arith.constant 0 : index
    %c0_37 = arith.constant 0 : index
    %30 = vector.load %arg9[%c0_36, %c0_37] : memref<1x9xf32, #tpu.memory_space<vmem>>, vector<1x9xf32>
    %31 = vector.broadcast %30 : vector<1x9xf32> to vector<8x9xf32>
    %32 = arith.addf %29, %31 : vector<8x9xf32>
    %c0_38 = arith.constant 0 : index
    %c0_39 = arith.constant 0 : index
    %33 = vector.load %arg10[%c0_38, %c0_39] : memref<1x9xf32, #tpu.memory_space<vmem>>, vector<1x9xf32>
    %c0_40 = arith.constant 0 : index
    %c0_41 = arith.constant 0 : index
    %34 = vector.load %arg11[%c0_40, %c0_41] : memref<1x9xf32, #tpu.memory_space<vmem>>, vector<1x9xf32>
    %35 = vector.extract_strided_slice %32 {offsets = [0, 0], sizes = [8, 4], strides = [1, 1]} : vector<8x9xf32> to vector<8x4xf32>
    %36 = vector.extract_strided_slice %33 {offsets = [0, 0], sizes = [1, 4], strides = [1, 1]} : vector<1x9xf32> to vector<1x4xf32>
    %37 = vector.extract_strided_slice %34 {offsets = [0, 0], sizes = [1, 4], strides = [1, 1]} : vector<1x9xf32> to vector<1x4xf32>
    %cst_42 = arith.constant dense<0.000000e+00> : vector<8xf32>
    %38 = vector.multi_reduction <add>, %35, %cst_42 [1] : vector<8x4xf32> to vector<8xf32>
    %39 = vector.shape_cast %38 : vector<8xf32> to vector<8x1xf32>
    %cst_43 = arith.constant 4.000000e+00 : f32
    %40 = vector.broadcast %cst_43 : f32 to vector<8x1xf32>
    %41 = arith.divf %39, %40 : vector<8x1xf32>
    %42 = vector.broadcast %41 : vector<8x1xf32> to vector<8x4xf32>
    %43 = arith.subf %35, %42 : vector<8x4xf32>
    %44 = arith.mulf %43, %43 : vector<8x4xf32>
    %cst_44 = arith.constant dense<0.000000e+00> : vector<8xf32>
    %45 = vector.multi_reduction <add>, %44, %cst_44 [1] : vector<8x4xf32> to vector<8xf32>
    %46 = vector.shape_cast %45 : vector<8xf32> to vector<8x1xf32>
    %cst_45 = arith.constant 4.000000e+00 : f32
    %47 = vector.broadcast %cst_45 : f32 to vector<8x1xf32>
    %48 = arith.divf %46, %47 : vector<8x1xf32>
    %49 = vector.broadcast %41 : vector<8x1xf32> to vector<8x4xf32>
    %50 = arith.subf %35, %49 : vector<8x4xf32>
    %cst_46 = arith.constant 9.99999974E-6 : f32
    %51 = vector.broadcast %cst_46 : f32 to vector<8x1xf32>
    %52 = arith.addf %48, %51 : vector<8x1xf32>
    %53 = math.rsqrt %52 : vector<8x1xf32>
    %54 = vector.broadcast %53 : vector<8x1xf32> to vector<8x4xf32>
    %55 = arith.mulf %50, %54 : vector<8x4xf32>
    %56 = vector.broadcast %36 : vector<1x4xf32> to vector<8x4xf32>
    %57 = arith.mulf %55, %56 : vector<8x4xf32>
    %58 = vector.broadcast %37 : vector<1x4xf32> to vector<8x4xf32>
    %59 = arith.addf %57, %58 : vector<8x4xf32>
    %cst_47 = arith.constant dense<0xFF800000> : vector<8xf32>
    %60 = vector.multi_reduction <maximumf>, %59, %cst_47 [1] : vector<8x4xf32> to vector<8xf32>
    %cst_48 = arith.constant 0xFF800000 : f32
    %61 = vector.broadcast %cst_48 : f32 to vector<8xf32>
    %62 = arith.maximumf %61, %60 : vector<8xf32>
    %63 = vector.shape_cast %62 : vector<8xf32> to vector<8x1xf32>
    %64 = vector.broadcast %63 : vector<8x1xf32> to vector<8x4xf32>
    %65 = arith.subf %59, %64 : vector<8x4xf32>
    %66 = math.exp %65 : vector<8x4xf32>
    %cst_49 = arith.constant dense<0.000000e+00> : vector<8xf32>
    %67 = vector.multi_reduction <add>, %66, %cst_49 [1] : vector<8x4xf32> to vector<8xf32>
    %68 = vector.shape_cast %67 : vector<8xf32> to vector<8x1xf32>
    %69 = vector.broadcast %68 : vector<8x1xf32> to vector<8x4xf32>
    %70 = arith.divf %66, %69 : vector<8x4xf32>
    %71 = vector.extract_strided_slice %32 {offsets = [0, 4], sizes = [8, 5], strides = [1, 1]} : vector<8x9xf32> to vector<8x5xf32>
    %72 = vector.extract_strided_slice %33 {offsets = [0, 4], sizes = [1, 5], strides = [1, 1]} : vector<1x9xf32> to vector<1x5xf32>
    %73 = vector.extract_strided_slice %34 {offsets = [0, 4], sizes = [1, 5], strides = [1, 1]} : vector<1x9xf32> to vector<1x5xf32>
    %cst_50 = arith.constant dense<0.000000e+00> : vector<8xf32>
    %74 = vector.multi_reduction <add>, %71, %cst_50 [1] : vector<8x5xf32> to vector<8xf32>
    %75 = vector.shape_cast %74 : vector<8xf32> to vector<8x1xf32>
    %cst_51 = arith.constant 5.000000e+00 : f32
    %76 = vector.broadcast %cst_51 : f32 to vector<8x1xf32>
    %77 = arith.divf %75, %76 : vector<8x1xf32>
    %78 = vector.broadcast %77 : vector<8x1xf32> to vector<8x5xf32>
    %79 = arith.subf %71, %78 : vector<8x5xf32>
    %80 = arith.mulf %79, %79 : vector<8x5xf32>
    %cst_52 = arith.constant dense<0.000000e+00> : vector<8xf32>
    %81 = vector.multi_reduction <add>, %80, %cst_52 [1] : vector<8x5xf32> to vector<8xf32>
    %82 = vector.shape_cast %81 : vector<8xf32> to vector<8x1xf32>
    %cst_53 = arith.constant 5.000000e+00 : f32
    %83 = vector.broadcast %cst_53 : f32 to vector<8x1xf32>
    %84 = arith.divf %82, %83 : vector<8x1xf32>
    %85 = vector.broadcast %77 : vector<8x1xf32> to vector<8x5xf32>
    %86 = arith.subf %71, %85 : vector<8x5xf32>
    %cst_54 = arith.constant 9.99999974E-6 : f32
    %87 = vector.broadcast %cst_54 : f32 to vector<8x1xf32>
    %88 = arith.addf %84, %87 : vector<8x1xf32>
    %89 = math.rsqrt %88 : vector<8x1xf32>
    %90 = vector.broadcast %89 : vector<8x1xf32> to vector<8x5xf32>
    %91 = arith.mulf %86, %90 : vector<8x5xf32>
    %92 = vector.broadcast %72 : vector<1x5xf32> to vector<8x5xf32>
    %93 = arith.mulf %91, %92 : vector<8x5xf32>
    %94 = vector.broadcast %73 : vector<1x5xf32> to vector<8x5xf32>
    %95 = arith.addf %93, %94 : vector<8x5xf32>
    %cst_55 = arith.constant dense<0xFF800000> : vector<8xf32>
    %96 = vector.multi_reduction <maximumf>, %95, %cst_55 [1] : vector<8x5xf32> to vector<8xf32>
    %cst_56 = arith.constant 0xFF800000 : f32
    %97 = vector.broadcast %cst_56 : f32 to vector<8xf32>
    %98 = arith.maximumf %97, %96 : vector<8xf32>
    %99 = vector.shape_cast %98 : vector<8xf32> to vector<8x1xf32>
    %100 = vector.broadcast %99 : vector<8x1xf32> to vector<8x5xf32>
    %101 = arith.subf %95, %100 : vector<8x5xf32>
    %102 = math.exp %101 : vector<8x5xf32>
    %cst_57 = arith.constant dense<0.000000e+00> : vector<8xf32>
    %103 = vector.multi_reduction <add>, %102, %cst_57 [1] : vector<8x5xf32> to vector<8xf32>
    %104 = vector.shape_cast %103 : vector<8xf32> to vector<8x1xf32>
    %105 = vector.broadcast %104 : vector<8x1xf32> to vector<8x5xf32>
    %106 = arith.divf %102, %105 : vector<8x5xf32>
    %107 = tpu.concatenate %70, %106 in 1 : vector<8x4xf32>, vector<8x5xf32> -> vector<8x9xf32>
    %c0_58 = arith.constant 0 : index
    %c0_59 = arith.constant 0 : index
    %108 = vector.load %arg12[%c0_58, %c0_59] : memref<8x9xf32, #tpu.memory_space<vmem>>, vector<8x9xf32>
    tpu.vector_store %arg12[%c0_58, %c0_59], %107 {strides = array<i32>} : memref<8x9xf32, #tpu.memory_space<vmem>>, vector<8x9xf32>,
    return
  }
  func.func @transform_0(%arg0: i32) -> (i32, i32, i32) {
    %c0_i32 = arith.constant 0 : i32
    %c0_i32_0 = arith.constant 0 : i32
    %c0_i32_1 = arith.constant 0 : i32
    return %c0_i32, %arg0, %c0_i32_0 : i32, i32, i32
  }
  func.func @transform_1(%arg0: i32) -> (i32, i32) {
    %c0_i32 = arith.constant 0 : i32
    %c0_i32_0 = arith.constant 0 : i32
    %c0_i32_1 = arith.constant 0 : i32
    return %c0_i32, %c0_i32_0 : i32, i32
  }
  func.func @transform_2(%arg0: i32) -> (i32, i32) {
    %c0_i32 = arith.constant 0 : i32
    %c0_i32_0 = arith.constant 0 : i32
    %c0_i32_1 = arith.constant 0 : i32
    return %c0_i32, %c0_i32_0 : i32, i32
  }
  func.func @transform_3(%arg0: i32) -> (i32, i32) {
    %c0_i32 = arith.constant 0 : i32
    %c0_i32_0 = arith.constant 0 : i32
    %c0_i32_1 = arith.constant 0 : i32
    return %c0_i32, %c0_i32_0 : i32, i32
  }
  func.func @transform_4(%arg0: i32) -> (i32, i32) {
    %c0_i32 = arith.constant 0 : i32
    %c0_i32_0 = arith.constant 0 : i32
    %c0_i32_1 = arith.constant 0 : i32
    return %c0_i32, %c0_i32_0 : i32, i32
  }
  func.func @transform_5(%arg0: i32) -> (i32, i32) {
    %c0_i32 = arith.constant 0 : i32
    %c0_i32_0 = arith.constant 0 : i32
    %c0_i32_1 = arith.constant 0 : i32
    return %c0_i32, %c0_i32_0 : i32, i32
  }
  func.func @transform_6(%arg0: i32) -> (i32, i32) {
    %c0_i32 = arith.constant 0 : i32
    %c0_i32_0 = arith.constant 0 : i32
    %c0_i32_1 = arith.constant 0 : i32
    return %c0_i32, %c0_i32_0 : i32, i32
  }
  func.func @transform_7(%arg0: i32) -> (i32, i32) {
    %c0_i32 = arith.constant 0 : i32
    %c0_i32_0 = arith.constant 0 : i32
    %c0_i32_1 = arith.constant 0 : i32
    return %c0_i32, %c0_i32_0 : i32, i32
  }
  func.func @transform_8(%arg0: i32) -> (i32, i32) {
    %c0_i32 = arith.constant 0 : i32
    %c0_i32_0 = arith.constant 0 : i32
    %c0_i32_1 = arith.constant 0 : i32
    return %c0_i32, %c0_i32_0 : i32, i32
  }
  func.func @transform_9(%arg0: i32) -> (i32, i32) {
    %c0_i32 = arith.constant 0 : i32
    %c0_i32_0 = arith.constant 0 : i32
    %c0_i32_1 = arith.constant 0 : i32
    return %c0_i32, %c0_i32_0 : i32, i32
  }
  func.func @transform_10(%arg0: i32) -> (i32, i32) {
    %c0_i32 = arith.constant 0 : i32
    %c0_i32_0 = arith.constant 0 : i32
    %c0_i32_1 = arith.constant 0 : i32
    return %c0_i32, %c0_i32_0 : i32, i32
  }
  func.func @transform_11(%arg0: i32) -> (i32, i32) {
    %c0_i32 = arith.constant 0 : i32
    %c0_i32_0 = arith.constant 0 : i32
    return %arg0, %c0_i32 : i32, i32
  }
}

</mosaic_0001>

<llo_original>
// kernel: lstm_forward.1
$region0: #{lstm_forward.1}
  #allocation0 [shape = 'u32[]', space=smem, size = 0x4, offset = 0x4, fixed_abs, tag = 'smem constant byte address 0x4 - core index']
  #allocation1 [shape = 'u32[72,128]{1,0:T(1,128)}', space=vmem, size = 0x9000, scoped, tag = 'internal scratch']
  #allocation2 [shape = 'f32[8,8,512]{2,1,0:T(8,128)}', space=vmem, size = 0x20000, scoped, tag = 'scratch operand']
  #allocation3 [shape = 'f32[8,8,128]{2,1,0:T(8,128)}', space=vmem, size = 0x8000, scoped, tag = 'scratch operand']
  %s0 = inlined_call_operand.vmem [shape: f32[8,8,4], index: 0, kind: input, shape index: {}]
  %s1 = inlined_call_operand.vmem [shape: f32[4,512], index: 1, kind: input, shape index: {}]
  %s2 = inlined_call_operand.hbm [shape: f32[128,512], index: 2, kind: input, shape index: {}]
  %s3 = inlined_call_operand.vmem [shape: f32[1,512], index: 3, kind: input, shape index: {}]
  %s4 = inlined_call_operand.hbm [shape: f32[128,512], index: 4, kind: input, shape index: {}]
  %s5 = inlined_call_operand.hbm [shape: f32[128,512], index: 5, kind: input, shape index: {}]
  %s6 = inlined_call_operand.vmem [shape: f32[1,512], index: 6, kind: input, shape index: {}]
  %s7 = inlined_call_operand.vmem [shape: f32[128,9], index: 7, kind: input, shape index: {}]
  %s8 = inlined_call_operand.vmem [shape: f32[1,9], index: 8, kind: input, shape index: {}]
  %s9 = inlined_call_operand.vmem [shape: f32[1,9], index: 9, kind: input, shape index: {}]
  %s10 = inlined_call_operand.vmem [shape: f32[1,9], index: 10, kind: input, shape index: {}]
  %s11 = inlined_call_operand.vmem [shape: f32[8,9], index: 11, kind: output, shape index: {}]
  %s12 = sld [smem:[#allocation0]]
  $region80: #{lstm_forward.1} parent=0
    _
  %s14 = ssub.s32 1, %s12
  %s15 = scalar_select 0, %s14, %s12
  $region1: #{lstm_forward.1} parent=0
    #allocation4 [shape = 'u8[262144]{0}', space=vmem, size = 0x40000, scoped, tag = 'input window, operand 2, single buffered']
    #allocation5 [shape = 's32[1]{0}', space=sflag, size = 0x4, scoped, tag = 'scoped memory for lstm_forward.1']
    #allocation6 [shape = 'u8[262144]{0}', space=vmem, size = 0x40000, scoped, tag = 'input window, operand 4, single buffered']
    #allocation7 [shape = 's32[1]{0}', space=sflag, size = 0x4, scoped, tag = 'scoped memory for lstm_forward.1']
    #allocation8 [shape = 'u8[262144]{0}', space=vmem, size = 0x40000, scoped, tag = 'input window, operand 5, single buffered']
    %16 = vsyncpa [#allocation5], 0
    %17 = vsyncpa [#allocation7], 0
    // Predicated region
    $region2: #{lstm_forward.1} parent=1 // pred_check
      _
    $region3: #{lstm_forward.1} parent=1 // pred_check_branch
      %19 = sbr.rel (0) target = $region5
    $region4: #{lstm_forward.1} parent=1 // pred_region
      _
    $region5: #{lstm_forward.1} parent=1 // pred_fallthru
      _
    // Predicated region
    $region6: #{lstm_forward.1} parent=1 // pred_check
      _
    $region7: #{lstm_forward.1} parent=1 // pred_check_branch
      %21 = sbr.rel (0) target = $region9
    $region8: #{lstm_forward.1} parent=1 // pred_region
      _
    $region9: #{lstm_forward.1} parent=1 // pred_fallthru
      _
    // Predicated region
    $region10: #{lstm_forward.1} parent=1 // pred_check
      _
    $region11: #{lstm_forward.1} parent=1 // pred_check_branch
      %23 = sbr.rel (0) target = $region13
    $region12: #{lstm_forward.1} parent=1 // pred_region
      %25 = vsyncadd [#allocation5], 0
      %s26 = sshll.u32 %s2, 4
      %s27 = int_to_ptr.hbm [resolvable:$true] %s26
      %s28 = sshll.u32 [#allocation4], 4
      %s29 = int_to_ptr.vmem [resolvable:$true] %s28
      %34 = dma.hbm_to_vmem [thread:$0]  %s27, 8192, %s29, [#allocation5], 512, 512, 32
    $region13: #{lstm_forward.1} parent=1 // pred_fallthru
      _
    // Predicated region
    $region14: #{lstm_forward.1} parent=1 // pred_check
      _
    $region15: #{lstm_forward.1} parent=1 // pred_check_branch
      %36 = sbr.rel (0) target = $region17
    $region16: #{lstm_forward.1} parent=1 // pred_region
      _
    $region17: #{lstm_forward.1} parent=1 // pred_fallthru
      _
    // Predicated region
    $region18: #{lstm_forward.1} parent=1 // pred_check
      _
    $region19: #{lstm_forward.1} parent=1 // pred_check_branch
      %38 = sbr.rel (0) target = $region21
    $region20: #{lstm_forward.1} parent=1 // pred_region
      %40 = vsyncadd [#allocation7], 0
      %s41 = sshll.u32 %s4, 4
      %s42 = int_to_ptr.hbm [resolvable:$true] %s41
      %s43 = sshll.u32 [#allocation6], 4
      %s44 = int_to_ptr.vmem [resolvable:$true] %s43
      %49 = dma.hbm_to_vmem [thread:$0]  %s42, 8192, %s44, [#allocation7], 512, 512, 32
    $region21: #{lstm_forward.1} parent=1 // pred_fallthru
      _
    // Predicated region
    $region22: #{lstm_forward.1} parent=1 // pred_check
      _
    $region23: #{lstm_forward.1} parent=1 // pred_check_branch
      %51 = sbr.rel (0) target = $region25
    $region24: #{lstm_forward.1} parent=1 // pred_region
      %53 = vsyncadd [#allocation7], 0
      %s54 = sshll.u32 %s5, 4
      %s55 = int_to_ptr.hbm [resolvable:$true] %s54
      %s56 = sshll.u32 [#allocation8], 4
      %s57 = int_to_ptr.vmem [resolvable:$true] %s56
      %62 = dma.hbm_to_vmem [thread:$0]  %s55, 8192, %s57, [#allocation7], 512, 512, 32
    $region25: #{lstm_forward.1} parent=1 // pred_fallthru
      _
    // Predicated region
    $region26: #{lstm_forward.1} parent=1 // pred_check
      _
    $region27: #{lstm_forward.1} parent=1 // pred_check_branch
      %64 = sbr.rel (0) target = $region29
    $region28: #{lstm_forward.1} parent=1 // pred_region
      _
    $region29: #{lstm_forward.1} parent=1 // pred_fallthru
      _
    // Predicated region
    $region30: #{lstm_forward.1} parent=1 // pred_check
      _
    $region31: #{lstm_forward.1} parent=1 // pred_check_branch
      %66 = sbr.rel (0) target = $region33
    $region32: #{lstm_forward.1} parent=1 // pred_region
      _
    $region33: #{lstm_forward.1} parent=1 // pred_fallthru
      _
    // Predicated region
    $region34: #{lstm_forward.1} parent=1 // pred_check
      _
    $region35: #{lstm_forward.1} parent=1 // pred_check_branch
      %68 = sbr.rel (0) target = $region37
    $region36: #{lstm_forward.1} parent=1 // pred_region
      _
    $region37: #{lstm_forward.1} parent=1 // pred_fallthru
      _
    // Predicated region
    $region38: #{lstm_forward.1} parent=1 // pred_check
      _
    $region39: #{lstm_forward.1} parent=1 // pred_check_branch
      %70 = sbr.rel (0) target = $region41
    $region40: #{lstm_forward.1} parent=1 // pred_region
      _
    $region41: #{lstm_forward.1} parent=1 // pred_fallthru
      _
    // Predicated region
    $region42: #{lstm_forward.1} parent=1 // pred_check
      _
    $region43: #{lstm_forward.1} parent=1 // pred_check_branch
      %72 = sbr.rel (0) target = $region45
    $region44: #{lstm_forward.1} parent=1 // pred_region
      _
    $region45: #{lstm_forward.1} parent=1 // pred_fallthru
      _
    // Predicated region
    $region46: #{lstm_forward.1} parent=1 // pred_check
      _
    $region47: #{lstm_forward.1} parent=1 // pred_check_branch
      %74 = sbr.rel (0) target = $region49
    $region48: #{lstm_forward.1} parent=1 // pred_region
      %76 = dma.done [#allocation5], 8192
    $region49: #{lstm_forward.1} parent=1 // pred_fallthru
      _
    // Predicated region
    $region50: #{lstm_forward.1} parent=1 // pred_check
      _
    $region51: #{lstm_forward.1} parent=1 // pred_check_branch
      %78 = sbr.rel (0) target = $region53
    $region52: #{lstm_forward.1} parent=1 // pred_region
      %80 = dma.done [#allocation7], 8192
    $region53: #{lstm_forward.1} parent=1 // pred_fallthru
      _
    // Predicated region
    $region54: #{lstm_forward.1} parent=1 // pred_check
      _
    $region55: #{lstm_forward.1} parent=1 // pred_check_branch
      %82 = sbr.rel (0) target = $region57
    $region56: #{lstm_forward.1} parent=1 // pred_region
      %84 = dma.done [#allocation7], 8192
    $region57: #{lstm_forward.1} parent=1 // pred_fallthru
      _
    %v85 = vld [vmem:[%s1] sm:$0xff]
    %v86 = vld [vmem:[%s1 + $0x8] sm:$0xff]
    %v87 = vld [vmem:[#allocation4] sm:$0xff]
    %v88 = vld [vmem:[#allocation4 + $0x8] sm:$0xff]
    %v89 = vld [vmem:[#allocation4 + $0x10] sm:$0xff]
    %v90 = vld [vmem:[#allocation4 + $0x18] sm:$0xff]
    %v91 = vld [vmem:[#allocation4 + $0x20] sm:$0xff]
    %v92 = vld [vmem:[#allocation4 + $0x28] sm:$0xff]
    %v93 = vld [vmem:[#allocation4 + $0x30] sm:$0xff]
    %v94 = vld [vmem:[#allocation4 + $0x38] sm:$0xff]
    %v95 = vld [vmem:[#allocation4 + $0x40] sm:$0xff]
    %v96 = vld [vmem:[#allocation4 + $0x48] sm:$0xff]
    %v97 = vld [vmem:[#allocation4 + $0x50] sm:$0xff]
    %v98 = vld [vmem:[#allocation4 + $0x58] sm:$0xff]
    %v99 = vld [vmem:[#allocation4 + $0x60] sm:$0xff]
    %v100 = vld [vmem:[#allocation4 + $0x68] sm:$0xff]
    %v101 = vld [vmem:[#allocation4 + $0x70] sm:$0xff]
    %v102 = vld [vmem:[#allocation4 + $0x78] sm:$0xff]
    %v103 = vld [vmem:[#allocation4 + $0x80] sm:$0xff]
    %v104 = vld [vmem:[#allocation4 + $0x88] sm:$0xff]
    %v105 = vld [vmem:[#allocation4 + $0x90] sm:$0xff]
    %v106 = vld [vmem:[#allocation4 + $0x98] sm:$0xff]
    %v107 = vld [vmem:[#allocation4 + $0xa0] sm:$0xff]
    %v108 = vld [vmem:[#allocation4 + $0xa8] sm:$0xff]
    %v109 = vld [vmem:[#allocation4 + $0xb0] sm:$0xff]
    %v110 = vld [vmem:[#allocation4 + $0xb8] sm:$0xff]
    %v111 = vld [vmem:[#allocation4 + $0xc0] sm:$0xff]
    %v112 = vld [vmem:[#allocation4 + $0xc8] sm:$0xff]
    %v113 = vld [vmem:[#allocation4 + $0xd0] sm:$0xff]
    %v114 = vld [vmem:[#allocation4 + $0xd8] sm:$0xff]
    %v115 = vld [vmem:[#allocation4 + $0xe0] sm:$0xff]
    %v116 = vld [vmem:[#allocation4 + $0xe8] sm:$0xff]
    %v117 = vld [vmem:[#allocation4 + $0xf0] sm:$0xff]
    %v118 = vld [vmem:[#allocation4 + $0xf8] sm:$0xff]
    %v119 = vld [vmem:[#allocation4 + $0x100] sm:$0xff]
    %v120 = vld [vmem:[#allocation4 + $0x108] sm:$0xff]
    %v121 = vld [vmem:[#allocation4 + $0x110] sm:$0xff]
    %v122 = vld [vmem:[#allocation4 + $0x118] sm:$0xff]
    %v123 = vld [vmem:[#allocation4 + $0x120] sm:$0xff]
    %v124 = vld [vmem:[#allocation4 + $0x128] sm:$0xff]
    %v125 = vld [vmem:[#allocation4 + $0x130] sm:$0xff]
    %v126 = vld [vmem:[#allocation4 + $0x138] sm:$0xff]
    %v127 = vld [vmem:[#allocation4 + $0x140] sm:$0xff]
    %v128 = vld [vmem:[#allocation4 + $0x148] sm:$0xff]
    %v129 = vld [vmem:[#allocation4 + $0x150] sm:$0xff]
    %v130 = vld [vmem:[#allocation4 + $0x158] sm:$0xff]
    %v131 = vld [vmem:[#allocation4 + $0x160] sm:$0xff]
    %v132 = vld [vmem:[#allocation4 + $0x168] sm:$0xff]
    %v133 = vld [vmem:[#allocation4 + $0x170] sm:$0xff]
    %v134 = vld [vmem:[#allocation4 + $0x178] sm:$0xff]
    %v135 = vld [vmem:[#allocation4 + $0x180] sm:$0xff]
    %v136 = vld [vmem:[#allocation4 + $0x188] sm:$0xff]
    %v137 = vld [vmem:[#allocation4 + $0x190] sm:$0xff]
    %v138 = vld [vmem:[#allocation4 + $0x198] sm:$0xff]
    %v139 = vld [vmem:[#allocation4 + $0x1a0] sm:$0xff]
    %v140 = vld [vmem:[#allocation4 + $0x1a8] sm:$0xff]
    %v141 = vld [vmem:[#allocation4 + $0x1b0] sm:$0xff]
    %v142 = vld [vmem:[#allocation4 + $0x1b8] sm:$0xff]
    %v143 = vld [vmem:[#allocation4 + $0x1c0] sm:$0xff]
    %v144 = vld [vmem:[#allocation4 + $0x1c8] sm:$0xff]
    %v145 = vld [vmem:[#allocation4 + $0x1d0] sm:$0xff]
    %v146 = vld [vmem:[#allocation4 + $0x1d8] sm:$0xff]
    %v147 = vld [vmem:[#allocation4 + $0x1e0] sm:$0xff]
    %v148 = vld [vmem:[#allocation4 + $0x1e8] sm:$0xff]
    %v149 = vld [vmem:[#allocation4 + $0x1f0] sm:$0xff]
    %v150 = vld [vmem:[#allocation4 + $0x1f8] sm:$0xff]
    %v151 = vld [vmem:[%s3] sm:$0xf]
    %v152 = vld [vmem:[%s0] sm:$0xff]
    %v153 = vld [vmem:[%s0 + $0x8] sm:$0xff]
    %v154 = vld [vmem:[%s0 + $0x10] sm:$0xff]
    %v155 = vld [vmem:[%s0 + $0x18] sm:$0xff]
    %v156 = vld [vmem:[%s0 + $0x20] sm:$0xff]
    %v157 = vld [vmem:[%s0 + $0x28] sm:$0xff]
    %v158 = vld [vmem:[%s0 + $0x30] sm:$0xff]
    %v159 = vld [vmem:[%s0 + $0x38] sm:$0xff]
    %v161 = vperm.slane %v151, 0
    %v162 = vperm.slane %v151, 1
    %v163 = vperm.slane %v151, 2
    %v164 = vperm.slane %v151, 3
    %171 = vst [vmem:[#allocation1] ss:$2 sm:$0xff] %v85
    %s172 = scalar_lea.vmem [#allocation1], 16
    %173 = vst [vmem:[%s172] ss:$2 sm:$0xff] %v86
    %v174 = vld.sshfl [vmem:[#allocation1] sm:$0xff pattern:$0x75316420]
    %v175 = vld.sshfl [vmem:[#allocation1 + $0x8] sm:$0xff pattern:$0x75316420]
    %v176 = vld.sshfl [vmem:[#allocation1 + $0x10] sm:$0xff pattern:$0x75316420]
    %v177 = vld.sshfl [vmem:[#allocation1 + $0x18] sm:$0xff pattern:$0x75316420]
    %vm178 = vcmask 31744
    %v180 = vsel %vm178, %v152, 0
    %v183 = vsel %vm178, %v153, 0
    %v186 = vsel %vm178, %v154, 0
    %v189 = vsel %vm178, %v155, 0
    %v192 = vsel %vm178, %v156, 0
    %v195 = vsel %vm178, %v157, 0
    %v198 = vsel %vm178, %v158, 0
    %v201 = vsel %vm178, %v159, 0
    %vm203 = vcmask 1043456
    %v204 = vsel %vm203, %v174, 0
    %v206 = vsel %vm203, %v175, 0
    %v208 = vsel %vm203, %v176, 0
    %v210 = vsel %vm203, %v177, 0
    %212 = vmatpush.msra.mxu0 0.0
    %213 = vmatpush.msra.mxu0 0.0
    %214 = vmatpush.msra.mxu0 0.0
    %215 = vmatpush.msra.mxu0 0.0
    %216 = vmatpush.msra.mxu0 0.0
    %217 = vmatpush.msra.mxu0 0.0
    %218 = vmatpush.msra.mxu0 0.0
    %219 = vmatpush.msra.mxu0 0.0
    %220 = vmatpush.msra.mxu0 0.0
    %221 = vmatpush.msra.mxu0 0.0
    %222 = vmatpush.msra.mxu0 0.0
    %223 = vmatpush.msra.mxu0 0.0
    %224 = vmatpush.msra.mxu0 0.0
    %225 = vmatpush.msra.mxu0 0.0
    %226 = vmatpush.msra.mxu0 0.0
    %227 = vmatpush.msra.mxu0 %v204
    %228 = vmatmul.f32.gmra.mxu0 %v180
    %v229 = vpop.f32.mrf.mxu0
    %v230 = vadd.f32 %v161, %v229
    %231 = vmatmul.f32.gmra.mxu0 %v183
    %v232 = vpop.f32.mrf.mxu0
    %v233 = vadd.f32 %v161, %v232
    %234 = vmatmul.f32.gmra.mxu0 %v186
    %v235 = vpop.f32.mrf.mxu0
    %v236 = vadd.f32 %v161, %v235
    %237 = vmatmul.f32.gmra.mxu0 %v189
    %v238 = vpop.f32.mrf.mxu0
    %v239 = vadd.f32 %v161, %v238
    %240 = vmatmul.f32.gmra.mxu0 %v192
    %v241 = vpop.f32.mrf.mxu0
    %v242 = vadd.f32 %v161, %v241
    %243 = vmatmul.f32.gmra.mxu0 %v195
    %v244 = vpop.f32.mrf.mxu0
    %v245 = vadd.f32 %v161, %v244
    %246 = vmatmul.f32.gmra.mxu0 %v198
    %v247 = vpop.f32.mrf.mxu0
    %v248 = vadd.f32 %v161, %v247
    %249 = vmatmul.f32.gmra.mxu0 %v201
    %v250 = vpop.f32.mrf.mxu0
    %v251 = vadd.f32 %v161, %v250
    %252 = vdwg.mxu0
    %253 = vmatpush.msra.mxu0 0.0
    %254 = vmatpush.msra.mxu0 0.0
    %255 = vmatpush.msra.mxu0 0.0
    %256 = vmatpush.msra.mxu0 0.0
    %257 = vmatpush.msra.mxu0 0.0
    %258 = vmatpush.msra.mxu0 0.0
    %259 = vmatpush.msra.mxu0 0.0
    %260 = vmatpush.msra.mxu0 0.0
    %261 = vmatpush.msra.mxu0 0.0
    %262 = vmatpush.msra.mxu0 0.0
    %263 = vmatpush.msra.mxu0 0.0
    %264 = vmatpush.msra.mxu0 0.0
    %265 = vmatpush.msra.mxu0 0.0
    %266 = vmatpush.msra.mxu0 0.0
    %267 = vmatpush.msra.mxu0 0.0
    %268 = vmatpush.msra.mxu0 %v206
    %269 = vmatmul.f32.gmra.mxu0 %v180
    %v270 = vpop.f32.mrf.mxu0
    %v271 = vadd.f32 %v162, %v270
    %272 = vmatmul.f32.gmra.mxu0 %v183
    %v273 = vpop.f32.mrf.mxu0
    %v274 = vadd.f32 %v162, %v273
    %275 = vmatmul.f32.gmra.mxu0 %v186
    %v276 = vpop.f32.mrf.mxu0
    %v277 = vadd.f32 %v162, %v276
    %278 = vmatmul.f32.gmra.mxu0 %v189
    %v279 = vpop.f32.mrf.mxu0
    %v280 = vadd.f32 %v162, %v279
    %281 = vmatmul.f32.gmra.mxu0 %v192
    %v282 = vpop.f32.mrf.mxu0
    %v283 = vadd.f32 %v162, %v282
    %284 = vmatmul.f32.gmra.mxu0 %v195
    %v285 = vpop.f32.mrf.mxu0
    %v286 = vadd.f32 %v162, %v285
    %287 = vmatmul.f32.gmra.mxu0 %v198
    %v288 = vpop.f32.mrf.mxu0
    %v289 = vadd.f32 %v162, %v288
    %290 = vmatmul.f32.gmra.mxu0 %v201
    %v291 = vpop.f32.mrf.mxu0
    %v292 = vadd.f32 %v162, %v291
    %293 = vdwg.mxu0
    %294 = vmatpush.msra.mxu0 0.0
    %295 = vmatpush.msra.mxu0 0.0
    %296 = vmatpush.msra.mxu0 0.0
    %297 = vmatpush.msra.mxu0 0.0
    %298 = vmatpush.msra.mxu0 0.0
    %299 = vmatpush.msra.mxu0 0.0
    %300 = vmatpush.msra.mxu0 0.0
    %301 = vmatpush.msra.mxu0 0.0
    %302 = vmatpush.msra.mxu0 0.0
    %303 = vmatpush.msra.mxu0 0.0
    %304 = vmatpush.msra.mxu0 0.0
    %305 = vmatpush.msra.mxu0 0.0
    %306 = vmatpush.msra.mxu0 0.0
    %307 = vmatpush.msra.mxu0 0.0
    %308 = vmatpush.msra.mxu0 0.0
    %309 = vmatpush.msra.mxu0 %v208
    %310 = vmatmul.f32.gmra.mxu0 %v180
    %v311 = vpop.f32.mrf.mxu0
    %v312 = vadd.f32 %v163, %v311
    %313 = vmatmul.f32.gmra.mxu0 %v183
    %v314 = vpop.f32.mrf.mxu0
    %v315 = vadd.f32 %v163, %v314
    %316 = vmatmul.f32.gmra.mxu0 %v186
    %v317 = vpop.f32.mrf.mxu0
    %v318 = vadd.f32 %v163, %v317
    %319 = vmatmul.f32.gmra.mxu0 %v189
    %v320 = vpop.f32.mrf.mxu0
    %v321 = vadd.f32 %v163, %v320
    %322 = vmatmul.f32.gmra.mxu0 %v192
    %v323 = vpop.f32.mrf.mxu0
    %v324 = vadd.f32 %v163, %v323
    %325 = vmatmul.f32.gmra.mxu0 %v195
    %v326 = vpop.f32.mrf.mxu0
    %v327 = vadd.f32 %v163, %v326
    %328 = vmatmul.f32.gmra.mxu0 %v198
    %v329 = vpop.f32.mrf.mxu0
    %v330 = vadd.f32 %v163, %v329
    %331 = vmatmul.f32.gmra.mxu0 %v201
    %v332 = vpop.f32.mrf.mxu0
    %v333 = vadd.f32 %v163, %v332
    %334 = vdwg.mxu0
    %335 = vmatpush.msra.mxu0 0.0
    %336 = vmatpush.msra.mxu0 0.0
    %337 = vmatpush.msra.mxu0 0.0
    %338 = vmatpush.msra.mxu0 0.0
    %339 = vmatpush.msra.mxu0 0.0
    %340 = vmatpush.msra.mxu0 0.0
    %341 = vmatpush.msra.mxu0 0.0
    %342 = vmatpush.msra.mxu0 0.0
    %343 = vmatpush.msra.mxu0 0.0
    %344 = vmatpush.msra.mxu0 0.0
    %345 = vmatpush.msra.mxu0 0.0
    %346 = vmatpush.msra.mxu0 0.0
    %347 = vmatpush.msra.mxu0 0.0
    %348 = vmatpush.msra.mxu0 0.0
    %349 = vmatpush.msra.mxu0 0.0
    %350 = vmatpush.msra.mxu0 %v210
    %351 = vmatmul.f32.gmra.mxu0 %v180
    %v352 = vpop.f32.mrf.mxu0
    %v353 = vadd.f32 %v164, %v352
    %354 = vmatmul.f32.gmra.mxu0 %v183
    %v355 = vpop.f32.mrf.mxu0
    %v356 = vadd.f32 %v164, %v355
    %357 = vmatmul.f32.gmra.mxu0 %v186
    %v358 = vpop.f32.mrf.mxu0
    %v359 = vadd.f32 %v164, %v358
    %360 = vmatmul.f32.gmra.mxu0 %v189
    %v361 = vpop.f32.mrf.mxu0
    %v362 = vadd.f32 %v164, %v361
    %363 = vmatmul.f32.gmra.mxu0 %v192
    %v364 = vpop.f32.mrf.mxu0
    %v365 = vadd.f32 %v164, %v364
    %366 = vmatmul.f32.gmra.mxu0 %v195
    %v367 = vpop.f32.mrf.mxu0
    %v368 = vadd.f32 %v164, %v367
    %369 = vmatmul.f32.gmra.mxu0 %v198
    %v370 = vpop.f32.mrf.mxu0
    %v371 = vadd.f32 %v164, %v370
    %372 = vmatmul.f32.gmra.mxu0 %v201
    %v373 = vpop.f32.mrf.mxu0
    %v374 = vadd.f32 %v164, %v373
    %375 = vdwg.mxu0
    %376 = vst [vmem:[#allocation2] sm:$0xff] %v230
    %377 = vst [vmem:[#allocation2 + $0x8] sm:$0xff] %v271
    %378 = vst [vmem:[#allocation2 + $0x10] sm:$0xff] %v312
    %379 = vst [vmem:[#allocation2 + $0x18] sm:$0xff] %v353
    %380 = vst [vmem:[#allocation2 + $0x20] sm:$0xff] %v233
    %381 = vst [vmem:[#allocation2 + $0x28] sm:$0xff] %v274
    %382 = vst [vmem:[#allocation2 + $0x30] sm:$0xff] %v315
    %383 = vst [vmem:[#allocation2 + $0x38] sm:$0xff] %v356
    %384 = vst [vmem:[#allocation2 + $0x40] sm:$0xff] %v236
    %385 = vst [vmem:[#allocation2 + $0x48] sm:$0xff] %v277
    %386 = vst [vmem:[#allocation2 + $0x50] sm:$0xff] %v318
    %387 = vst [vmem:[#allocation2 + $0x58] sm:$0xff] %v359
    %388 = vst [vmem:[#allocation2 + $0x60] sm:$0xff] %v239
    %389 = vst [vmem:[#allocation2 + $0x68] sm:$0xff] %v280
    %390 = vst [vmem:[#allocation2 + $0x70] sm:$0xff] %v321
    %391 = vst [vmem:[#allocation2 + $0x78] sm:$0xff] %v362
    %392 = vst [vmem:[#allocation2 + $0x80] sm:$0xff] %v242
    %393 = vst [vmem:[#allocation2 + $0x88] sm:$0xff] %v283
    %394 = vst [vmem:[#allocation2 + $0x90] sm:$0xff] %v324
    %395 = vst [vmem:[#allocation2 + $0x98] sm:$0xff] %v365
    %396 = vst [vmem:[#allocation2 + $0xa0] sm:$0xff] %v245
    %397 = vst [vmem:[#allocation2 + $0xa8] sm:$0xff] %v286
    %398 = vst [vmem:[#allocation2 + $0xb0] sm:$0xff] %v327
    %399 = vst [vmem:[#allocation2 + $0xb8] sm:$0xff] %v368
    %400 = vst [vmem:[#allocation2 + $0xc0] sm:$0xff] %v248
    %401 = vst [vmem:[#allocation2 + $0xc8] sm:$0xff] %v289
    %402 = vst [vmem:[#allocation2 + $0xd0] sm:$0xff] %v330
    %403 = vst [vmem:[#allocation2 + $0xd8] sm:$0xff] %v371
    %404 = vst [vmem:[#allocation2 + $0xe0] sm:$0xff] %v251
    %405 = vst [vmem:[#allocation2 + $0xe8] sm:$0xff] %v292
    %406 = vst [vmem:[#allocation2 + $0xf0] sm:$0xff] %v333
    %407 = vst [vmem:[#allocation2 + $0xf8] sm:$0xff] %v374
    loop: start=0, step=1, limit=2
    $region58: #{lstm_forward.1} parent=1 // loop_pre_header
      _
    $region59: #{lstm_forward.1} parent=1 // loop_header
      %s409 = sphi 0, %s413
      %p410 = scmp.ge.s32.totalorder %s409, 2
      %v414 = vphi 0.0, %v864
      %v415 = vphi 0.0, %v862
    $region60: #{lstm_forward.1} parent=1 // loop_header_branch
      %412 = sbr.rel (%p410) target = $region64
    $region61: #{lstm_forward.1} parent=1 // loop_body
      %s416 = smul.u32 %s409, 4
      %s417 = smul.u32 %s416, 4
      %s418 = smul.addr %s417, 8
      %s419 = scalar_lea.vmem [#allocation2], %s418
      %v420 = vld [vmem:[%s419] sm:$0xff]
      %v421 = vld [vmem:[%s419 + $0x8] sm:$0xff]
      %v422 = vld [vmem:[%s419 + $0x10] sm:$0xff]
      %v423 = vld [vmem:[%s419 + $0x18] sm:$0xff]
      %424 = vmatpush.msra.mxu0 %v147
      %425 = vmatpush.msra.mxu0 %v143
      %426 = vmatpush.msra.mxu0 %v139
      %427 = vmatpush.msra.mxu0 %v135
      %428 = vmatpush.msra.mxu0 %v131
      %429 = vmatpush.msra.mxu0 %v127
      %430 = vmatpush.msra.mxu0 %v123
      %431 = vmatpush.msra.mxu0 %v119
      %432 = vmatpush.msra.mxu0 %v115
      %433 = vmatpush.msra.mxu0 %v111
      %434 = vmatpush.msra.mxu0 %v107
      %435 = vmatpush.msra.mxu0 %v103
      %436 = vmatpush.msra.mxu0 %v99
      %437 = vmatpush.msra.mxu0 %v95
      %438 = vmatpush.msra.mxu0 %v91
      %439 = vmatpush.msra.mxu0 %v87
      %440 = vmatmul.f32.gmra.mxu0 %v414
      %v441 = vpop.f32.mrf.mxu0
      %v442 = vadd.f32 0.0, %v441
      %443 = vdwg.mxu0
      %444 = vmatpush.msra.mxu0 %v148
      %445 = vmatpush.msra.mxu0 %v144
      %446 = vmatpush.msra.mxu0 %v140
      %447 = vmatpush.msra.mxu0 %v136
      %448 = vmatpush.msra.mxu0 %v132
      %449 = vmatpush.msra.mxu0 %v128
      %450 = vmatpush.msra.mxu0 %v124
      %451 = vmatpush.msra.mxu0 %v120
      %452 = vmatpush.msra.mxu0 %v116
      %453 = vmatpush.msra.mxu0 %v112
      %454 = vmatpush.msra.mxu0 %v108
      %455 = vmatpush.msra.mxu0 %v104
      %456 = vmatpush.msra.mxu0 %v100
      %457 = vmatpush.msra.mxu0 %v96
      %458 = vmatpush.msra.mxu0 %v92
      %459 = vmatpush.msra.mxu0 %v88
      %460 = vmatmul.f32.gmra.mxu0 %v414
      %v461 = vpop.f32.mrf.mxu0
      %v462 = vadd.f32 0.0, %v461
      %463 = vdwg.mxu0
      %464 = vmatpush.msra.mxu0 %v149
      %465 = vmatpush.msra.mxu0 %v145
      %466 = vmatpush.msra.mxu0 %v141
      %467 = vmatpush.msra.mxu0 %v137
      %468 = vmatpush.msra.mxu0 %v133
      %469 = vmatpush.msra.mxu0 %v129
      %470 = vmatpush.msra.mxu0 %v125
      %471 = vmatpush.msra.mxu0 %v121
      %472 = vmatpush.msra.mxu0 %v117
      %473 = vmatpush.msra.mxu0 %v113
      %474 = vmatpush.msra.mxu0 %v109
      %475 = vmatpush.msra.mxu0 %v105
      %476 = vmatpush.msra.mxu0 %v101
      %477 = vmatpush.msra.mxu0 %v97
      %478 = vmatpush.msra.mxu0 %v93
      %479 = vmatpush.msra.mxu0 %v89
      %480 = vmatmul.f32.gmra.mxu0 %v414
      %v481 = vpop.f32.mrf.mxu0
      %v482 = vadd.f32 0.0, %v481
      %483 = vdwg.mxu0
      %484 = vmatpush.msra.mxu0 %v150
      %485 = vmatpush.msra.mxu0 %v146
      %486 = vmatpush.msra.mxu0 %v142
      %487 = vmatpush.msra.mxu0 %v138
      %488 = vmatpush.msra.mxu0 %v134
      %489 = vmatpush.msra.mxu0 %v130
      %490 = vmatpush.msra.mxu0 %v126
      %491 = vmatpush.msra.mxu0 %v122
      %492 = vmatpush.msra.mxu0 %v118
      %493 = vmatpush.msra.mxu0 %v114
      %494 = vmatpush.msra.mxu0 %v110
      %495 = vmatpush.msra.mxu0 %v106
      %496 = vmatpush.msra.mxu0 %v102
      %497 = vmatpush.msra.mxu0 %v98
      %498 = vmatpush.msra.mxu0 %v94
      %499 = vmatpush.msra.mxu0 %v90
      %500 = vmatmul.f32.gmra.mxu0 %v414
      %v501 = vpop.f32.mrf.mxu0
      %v502 = vadd.f32 0.0, %v501
      %503 = vdwg.mxu0
      %v504 = vadd.f32 %v420, %v442
      %v505 = vadd.f32 %v421, %v462
      %v506 = vadd.f32 %v422, %v482
      %v507 = vadd.f32 %v423, %v502
      %v508 = vmul.f32 %v504, 0.5
      %v509 = vmul.f32 %v505, 0.5
      %v510 = vmul.f32 %v506, 0.5
      %v511 = vtanh.pop %v508
      %v512 = vtanh.pop %v509
      %v513 = vtanh.pop %v510
      %v514 = vadd.f32 %v511, 1.0
      %v515 = vadd.f32 %v512, 1.0
      %v516 = vadd.f32 %v513, 1.0
      %v517 = vmul.f32 %v514, 0.5
      %v518 = vmul.f32 %v515, 0.5
      %v519 = vmul.f32 %v516, 0.5
      %v520 = vtanh.pop %v507
      %v521 = vmul.f32 %v518, %v415
      %v522 = vmul.f32 %v517, %v520
      %v523 = vadd.f32 %v521, %v522
      %v524 = vtanh.pop %v523
      %v525 = vmul.f32 %v519, %v524
      %s526 = smul.u32 %s416, 8
      %s527 = scalar_lea.vmem [#allocation3], %s526
      %528 = vst [vmem:[%s527] sm:$0xff] %v525
      %s529 = sadd.s32 %s416, 1
      %s530 = smul.u32 %s529, 4
      %s531 = smul.addr %s530, 8
      %s532 = scalar_lea.vmem [#allocation2], %s531
      %v533 = vld [vmem:[%s532] sm:$0xff]
      %v534 = vld [vmem:[%s532 + $0x8] sm:$0xff]
      %v535 = vld [vmem:[%s532 + $0x10] sm:$0xff]
      %v536 = vld [vmem:[%s532 + $0x18] sm:$0xff]
      %537 = vmatpush.msra.mxu0 %v147
      %538 = vmatpush.msra.mxu0 %v143
      %539 = vmatpush.msra.mxu0 %v139
      %540 = vmatpush.msra.mxu0 %v135
      %541 = vmatpush.msra.mxu0 %v131
      %542 = vmatpush.msra.mxu0 %v127
      %543 = vmatpush.msra.mxu0 %v123
      %544 = vmatpush.msra.mxu0 %v119
      %545 = vmatpush.msra.mxu0 %v115
      %546 = vmatpush.msra.mxu0 %v111
      %547 = vmatpush.msra.mxu0 %v107
      %548 = vmatpush.msra.mxu0 %v103
      %549 = vmatpush.msra.mxu0 %v99
      %550 = vmatpush.msra.mxu0 %v95
      %551 = vmatpush.msra.mxu0 %v91
      %552 = vmatpush.msra.mxu0 %v87
      %553 = vmatmul.f32.gmra.mxu0 %v525
      %v554 = vpop.f32.mrf.mxu0
      %v555 = vadd.f32 0.0, %v554
      %556 = vdwg.mxu0
      %557 = vmatpush.msra.mxu0 %v148
      %558 = vmatpush.msra.mxu0 %v144
      %559 = vmatpush.msra.mxu0 %v140
      %560 = vmatpush.msra.mxu0 %v136
      %561 = vmatpush.msra.mxu0 %v132
      %562 = vmatpush.msra.mxu0 %v128
      %563 = vmatpush.msra.mxu0 %v124
      %564 = vmatpush.msra.mxu0 %v120
      %565 = vmatpush.msra.mxu0 %v116
      %566 = vmatpush.msra.mxu0 %v112
      %567 = vmatpush.msra.mxu0 %v108
      %568 = vmatpush.msra.mxu0 %v104
      %569 = vmatpush.msra.mxu0 %v100
      %570 = vmatpush.msra.mxu0 %v96
      %571 = vmatpush.msra.mxu0 %v92
      %572 = vmatpush.msra.mxu0 %v88
      %573 = vmatmul.f32.gmra.mxu0 %v525
      %v574 = vpop.f32.mrf.mxu0
      %v575 = vadd.f32 0.0, %v574
      %576 = vdwg.mxu0
      %577 = vmatpush.msra.mxu0 %v149
      %578 = vmatpush.msra.mxu0 %v145
      %579 = vmatpush.msra.mxu0 %v141
      %580 = vmatpush.msra.mxu0 %v137
      %581 = vmatpush.msra.mxu0 %v133
      %582 = vmatpush.msra.mxu0 %v129
      %583 = vmatpush.msra.mxu0 %v125
      %584 = vmatpush.msra.mxu0 %v121
      %585 = vmatpush.msra.mxu0 %v117
      %586 = vmatpush.msra.mxu0 %v113
      %587 = vmatpush.msra.mxu0 %v109
      %588 = vmatpush.msra.mxu0 %v105
      %589 = vmatpush.msra.mxu0 %v101
      %590 = vmatpush.msra.mxu0 %v97
      %591 = vmatpush.msra.mxu0 %v93
      %592 = vmatpush.msra.mxu0 %v89
      %593 = vmatmul.f32.gmra.mxu0 %v525
      %v594 = vpop.f32.mrf.mxu0
      %v595 = vadd.f32 0.0, %v594
      %596 = vdwg.mxu0
      %597 = vmatpush.msra.mxu0 %v150
      %598 = vmatpush.msra.mxu0 %v146
      %599 = vmatpush.msra.mxu0 %v142
      %600 = vmatpush.msra.mxu0 %v138
      %601 = vmatpush.msra.mxu0 %v134
      %602 = vmatpush.msra.mxu0 %v130
      %603 = vmatpush.msra.mxu0 %v126
      %604 = vmatpush.msra.mxu0 %v122
      %605 = vmatpush.msra.mxu0 %v118
      %606 = vmatpush.msra.mxu0 %v114
      %607 = vmatpush.msra.mxu0 %v110
      %608 = vmatpush.msra.mxu0 %v106
      %609 = vmatpush.msra.mxu0 %v102
      %610 = vmatpush.msra.mxu0 %v98
      %611 = vmatpush.msra.mxu0 %v94
      %612 = vmatpush.msra.mxu0 %v90
      %613 = vmatmul.f32.gmra.mxu0 %v525
      %v614 = vpop.f32.mrf.mxu0
      %v615 = vadd.f32 0.0, %v614
      %616 = vdwg.mxu0
      %v617 = vadd.f32 %v533, %v555
      %v618 = vadd.f32 %v534, %v575
      %v619 = vadd.f32 %v535, %v595
      %v620 = vadd.f32 %v536, %v615
      %v621 = vmul.f32 %v617, 0.5
      %v622 = vmul.f32 %v618, 0.5
      %v623 = vmul.f32 %v619, 0.5
      %v624 = vtanh.pop %v621
      %v625 = vtanh.pop %v622
      %v626 = vtanh.pop %v623
      %v627 = vadd.f32 %v624, 1.0
      %v628 = vadd.f32 %v625, 1.0
      %v629 = vadd.f32 %v626, 1.0
      %v630 = vmul.f32 %v627, 0.5
      %v631 = vmul.f32 %v628, 0.5
      %v632 = vmul.f32 %v629, 0.5
      %v633 = vtanh.pop %v620
      %v634 = vmul.f32 %v631, %v523
      %v635 = vmul.f32 %v630, %v633
      %v636 = vadd.f32 %v634, %v635
      %v637 = vtanh.pop %v636
      %v638 = vmul.f32 %v632, %v637
      %s639 = smul.u32 %s529, 8
      %s640 = scalar_lea.vmem [#allocation3], %s639
      %641 = vst [vmem:[%s640] sm:$0xff] %v638
      %s642 = sadd.s32 %s416, 2
      %s643 = smul.u32 %s642, 4
      %s644 = smul.addr %s643, 8
      %s645 = scalar_lea.vmem [#allocation2], %s644
      %v646 = vld [vmem:[%s645] sm:$0xff]
      %v647 = vld [vmem:[%s645 + $0x8] sm:$0xff]
      %v648 = vld [vmem:[%s645 + $0x10] sm:$0xff]
      %v649 = vld [vmem:[%s645 + $0x18] sm:$0xff]
      %650 = vmatpush.msra.mxu0 %v147
      %651 = vmatpush.msra.mxu0 %v143
      %652 = vmatpush.msra.mxu0 %v139
      %653 = vmatpush.msra.mxu0 %v135
      %654 = vmatpush.msra.mxu0 %v131
      %655 = vmatpush.msra.mxu0 %v127
      %656 = vmatpush.msra.mxu0 %v123
      %657 = vmatpush.msra.mxu0 %v119
      %658 = vmatpush.msra.mxu0 %v115
      %659 = vmatpush.msra.mxu0 %v111
      %660 = vmatpush.msra.mxu0 %v107
      %661 = vmatpush.msra.mxu0 %v103
      %662 = vmatpush.msra.mxu0 %v99
      %663 = vmatpush.msra.mxu0 %v95
      %664 = vmatpush.msra.mxu0 %v91
      %665 = vmatpush.msra.mxu0 %v87
      %666 = vmatmul.f32.gmra.mxu0 %v638
      %v667 = vpop.f32.mrf.mxu0
      %v668 = vadd.f32 0.0, %v667
      %669 = vdwg.mxu0
      %670 = vmatpush.msra.mxu0 %v148
      %671 = vmatpush.msra.mxu0 %v144
      %672 = vmatpush.msra.mxu0 %v140
      %673 = vmatpush.msra.mxu0 %v136
      %674 = vmatpush.msra.mxu0 %v132
      %675 = vmatpush.msra.mxu0 %v128
      %676 = vmatpush.msra.mxu0 %v124
      %677 = vmatpush.msra.mxu0 %v120
      %678 = vmatpush.msra.mxu0 %v116
      %679 = vmatpush.msra.mxu0 %v112
      %680 = vmatpush.msra.mxu0 %v108
      %681 = vmatpush.msra.mxu0 %v104
      %682 = vmatpush.msra.mxu0 %v100
      %683 = vmatpush.msra.mxu0 %v96
      %684 = vmatpush.msra.mxu0 %v92
      %685 = vmatpush.msra.mxu0 %v88
      %686 = vmatmul.f32.gmra.mxu0 %v638
      %v687 = vpop.f32.mrf.mxu0
      %v688 = vadd.f32 0.0, %v687
      %689 = vdwg.mxu0
      %690 = vmatpush.msra.mxu0 %v149
      %691 = vmatpush.msra.mxu0 %v145
      %692 = vmatpush.msra.mxu0 %v141
      %693 = vmatpush.msra.mxu0 %v137
      %694 = vmatpush.msra.mxu0 %v133
      %695 = vmatpush.msra.mxu0 %v129
      %696 = vmatpush.msra.mxu0 %v125
      %697 = vmatpush.msra.mxu0 %v121
      %698 = vmatpush.msra.mxu0 %v117
      %699 = vmatpush.msra.mxu0 %v113
      %700 = vmatpush.msra.mxu0 %v109
      %701 = vmatpush.msra.mxu0 %v105
      %702 = vmatpush.msra.mxu0 %v101
      %703 = vmatpush.msra.mxu0 %v97
      %704 = vmatpush.msra.mxu0 %v93
      %705 = vmatpush.msra.mxu0 %v89
      %706 = vmatmul.f32.gmra.mxu0 %v638
      %v707 = vpop.f32.mrf.mxu0
      %v708 = vadd.f32 0.0, %v707
      %709 = vdwg.mxu0
      %710 = vmatpush.msra.mxu0 %v150
      %711 = vmatpush.msra.mxu0 %v146
      %712 = vmatpush.msra.mxu0 %v142
      %713 = vmatpush.msra.mxu0 %v138
      %714 = vmatpush.msra.mxu0 %v134
      %715 = vmatpush.msra.mxu0 %v130
      %716 = vmatpush.msra.mxu0 %v126
      %717 = vmatpush.msra.mxu0 %v122
      %718 = vmatpush.msra.mxu0 %v118
      %719 = vmatpush.msra.mxu0 %v114
      %720 = vmatpush.msra.mxu0 %v110
      %721 = vmatpush.msra.mxu0 %v106
      %722 = vmatpush.msra.mxu0 %v102
      %723 = vmatpush.msra.mxu0 %v98
      %724 = vmatpush.msra.mxu0 %v94
      %725 = vmatpush.msra.mxu0 %v90
      %726 = vmatmul.f32.gmra.mxu0 %v638
      %v727 = vpop.f32.mrf.mxu0
      %v728 = vadd.f32 0.0, %v727
      %729 = vdwg.mxu0
      %v730 = vadd.f32 %v646, %v668
      %v731 = vadd.f32 %v647, %v688
      %v732 = vadd.f32 %v648, %v708
      %v733 = vadd.f32 %v649, %v728
      %v734 = vmul.f32 %v730, 0.5
      %v735 = vmul.f32 %v731, 0.5
      %v736 = vmul.f32 %v732, 0.5
      %v737 = vtanh.pop %v734
      %v738 = vtanh.pop %v735
      %v739 = vtanh.pop %v736
      %v740 = vadd.f32 %v737, 1.0
      %v741 = vadd.f32 %v738, 1.0
      %v742 = vadd.f32 %v739, 1.0
      %v743 = vmul.f32 %v740, 0.5
      %v744 = vmul.f32 %v741, 0.5
      %v745 = vmul.f32 %v742, 0.5
      %v746 = vtanh.pop %v733
      %v747 = vmul.f32 %v744, %v636
      %v748 = vmul.f32 %v743, %v746
      %v749 = vadd.f32 %v747, %v748
      %v750 = vtanh.pop %v749
      %v751 = vmul.f32 %v745, %v750
      %s752 = smul.u32 %s642, 8
      %s753 = scalar_lea.vmem [#allocation3], %s752
      %754 = vst [vmem:[%s753] sm:$0xff] %v751
      %s755 = sadd.s32 %s416, 3
      %s756 = smul.u32 %s755, 4
      %s757 = smul.addr %s756, 8
      %s758 = scalar_lea.vmem [#allocation2], %s757
      %v759 = vld [vmem:[%s758] sm:$0xff]
      %v760 = vld [vmem:[%s758 + $0x8] sm:$0xff]
      %v761 = vld [vmem:[%s758 + $0x10] sm:$0xff]
      %v762 = vld [vmem:[%s758 + $0x18] sm:$0xff]
      %763 = vmatpush.msra.mxu0 %v147
      %764 = vmatpush.msra.mxu0 %v143
      %765 = vmatpush.msra.mxu0 %v139
      %766 = vmatpush.msra.mxu0 %v135
      %767 = vmatpush.msra.mxu0 %v131
      %768 = vmatpush.msra.mxu0 %v127
      %769 = vmatpush.msra.mxu0 %v123
      %770 = vmatpush.msra.mxu0 %v119
      %771 = vmatpush.msra.mxu0 %v115
      %772 = vmatpush.msra.mxu0 %v111
      %773 = vmatpush.msra.mxu0 %v107
      %774 = vmatpush.msra.mxu0 %v103
      %775 = vmatpush.msra.mxu0 %v99
      %776 = vmatpush.msra.mxu0 %v95
      %777 = vmatpush.msra.mxu0 %v91
      %778 = vmatpush.msra.mxu0 %v87
      %779 = vmatmul.f32.gmra.mxu0 %v751
      %v780 = vpop.f32.mrf.mxu0
      %v781 = vadd.f32 0.0, %v780
      %782 = vdwg.mxu0
      %783 = vmatpush.msra.mxu0 %v148
      %784 = vmatpush.msra.mxu0 %v144
      %785 = vmatpush.msra.mxu0 %v140
      %786 = vmatpush.msra.mxu0 %v136
      %787 = vmatpush.msra.mxu0 %v132
      %788 = vmatpush.msra.mxu0 %v128
      %789 = vmatpush.msra.mxu0 %v124
      %790 = vmatpush.msra.mxu0 %v120
      %791 = vmatpush.msra.mxu0 %v116
      %792 = vmatpush.msra.mxu0 %v112
      %793 = vmatpush.msra.mxu0 %v108
      %794 = vmatpush.msra.mxu0 %v104
      %795 = vmatpush.msra.mxu0 %v100
      %796 = vmatpush.msra.mxu0 %v96
      %797 = vmatpush.msra.mxu0 %v92
      %798 = vmatpush.msra.mxu0 %v88
      %799 = vmatmul.f32.gmra.mxu0 %v751
      %v800 = vpop.f32.mrf.mxu0
      %v801 = vadd.f32 0.0, %v800
      %802 = vdwg.mxu0
      %803 = vmatpush.msra.mxu0 %v149
      %804 = vmatpush.msra.mxu0 %v145
      %805 = vmatpush.msra.mxu0 %v141
      %806 = vmatpush.msra.mxu0 %v137
      %807 = vmatpush.msra.mxu0 %v133
      %808 = vmatpush.msra.mxu0 %v129
      %809 = vmatpush.msra.mxu0 %v125
      %810 = vmatpush.msra.mxu0 %v121
      %811 = vmatpush.msra.mxu0 %v117
      %812 = vmatpush.msra.mxu0 %v113
      %813 = vmatpush.msra.mxu0 %v109
      %814 = vmatpush.msra.mxu0 %v105
      %815 = vmatpush.msra.mxu0 %v101
      %816 = vmatpush.msra.mxu0 %v97
      %817 = vmatpush.msra.mxu0 %v93
      %818 = vmatpush.msra.mxu0 %v89
      %819 = vmatmul.f32.gmra.mxu0 %v751
      %v820 = vpop.f32.mrf.mxu0
      %v821 = vadd.f32 0.0, %v820
      %822 = vdwg.mxu0
      %823 = vmatpush.msra.mxu0 %v150
      %824 = vmatpush.msra.mxu0 %v146
      %825 = vmatpush.msra.mxu0 %v142
      %826 = vmatpush.msra.mxu0 %v138
      %827 = vmatpush.msra.mxu0 %v134
      %828 = vmatpush.msra.mxu0 %v130
      %829 = vmatpush.msra.mxu0 %v126
      %830 = vmatpush.msra.mxu0 %v122
      %831 = vmatpush.msra.mxu0 %v118
      %832 = vmatpush.msra.mxu0 %v114
      %833 = vmatpush.msra.mxu0 %v110
      %834 = vmatpush.msra.mxu0 %v106
      %835 = vmatpush.msra.mxu0 %v102
      %836 = vmatpush.msra.mxu0 %v98
      %837 = vmatpush.msra.mxu0 %v94
      %838 = vmatpush.msra.mxu0 %v90
      %839 = vmatmul.f32.gmra.mxu0 %v751
      %v840 = vpop.f32.mrf.mxu0
      %v841 = vadd.f32 0.0, %v840
      %842 = vdwg.mxu0
      %v843 = vadd.f32 %v759, %v781
      %v844 = vadd.f32 %v760, %v801
      %v845 = vadd.f32 %v761, %v821
      %v846 = vadd.f32 %v762, %v841
      %v847 = vmul.f32 %v843, 0.5
      %v848 = vmul.f32 %v844, 0.5
      %v849 = vmul.f32 %v845, 0.5
      %v850 = vtanh.pop %v847
      %v851 = vtanh.pop %v848
      %v852 = vtanh.pop %v849
      %v853 = vadd.f32 %v850, 1.0
      %v854 = vadd.f32 %v851, 1.0
      %v855 = vadd.f32 %v852, 1.0
      %v856 = vmul.f32 %v853, 0.5
      %v857 = vmul.f32 %v854, 0.5
      %v858 = vmul.f32 %v855, 0.5
      %v859 = vtanh.pop %v846
      %v860 = vmul.f32 %v857, %v749
      %v861 = vmul.f32 %v856, %v859
      %v862 = vadd.f32 %v860, %v861
      %v863 = vtanh.pop %v862
      %v864 = vmul.f32 %v858, %v863
      %s865 = smul.u32 %s755, 8
      %s866 = scalar_lea.vmem [#allocation3], %s865
      %867 = vst [vmem:[%s866] sm:$0xff] %v864
    $region62: #{lstm_forward.1} parent=1 // loop_footer
      %s413 = sadd.s32 1, %s409
    $region63: #{lstm_forward.1} parent=1 // loop_footer_branch
      %408 = sbr.rel target = $region59
    $region64: #{lstm_forward.1} parent=1 // loop_exit
      _
    %v868 = vld [vmem:[#allocation6] sm:$0xff]
    %v869 = vld [vmem:[#allocation6 + $0x8] sm:$0xff]
    %v870 = vld [vmem:[#allocation6 + $0x10] sm:$0xff]
    %v871 = vld [vmem:[#allocation6 + $0x18] sm:$0xff]
    %v872 = vld [vmem:[#allocation6 + $0x20] sm:$0xff]
    %v873 = vld [vmem:[#allocation6 + $0x28] sm:$0xff]
    %v874 = vld [vmem:[#allocation6 + $0x30] sm:$0xff]
    %v875 = vld [vmem:[#allocation6 + $0x38] sm:$0xff]
    %v876 = vld [vmem:[#allocation6 + $0x40] sm:$0xff]
    %v877 = vld [vmem:[#allocation6 + $0x48] sm:$0xff]
    %v878 = vld [vmem:[#allocation6 + $0x50] sm:$0xff]
    %v879 = vld [vmem:[#allocation6 + $0x58] sm:$0xff]
    %v880 = vld [vmem:[#allocation6 + $0x60] sm:$0xff]
    %v881 = vld [vmem:[#allocation6 + $0x68] sm:$0xff]
    %v882 = vld [vmem:[#allocation6 + $0x70] sm:$0xff]
    %v883 = vld [vmem:[#allocation6 + $0x78] sm:$0xff]
    %v884 = vld [vmem:[#allocation6 + $0x80] sm:$0xff]
    %v885 = vld [vmem:[#allocation6 + $0x88] sm:$0xff]
    %v886 = vld [vmem:[#allocation6 + $0x90] sm:$0xff]
    %v887 = vld [vmem:[#allocation6 + $0x98] sm:$0xff]
    %v888 = vld [vmem:[#allocation6 + $0xa0] sm:$0xff]
    %v889 = vld [vmem:[#allocation6 + $0xa8] sm:$0xff]
    %v890 = vld [vmem:[#allocation6 + $0xb0] sm:$0xff]
    %v891 = vld [vmem:[#allocation6 + $0xb8] sm:$0xff]
    %v892 = vld [vmem:[#allocation6 + $0xc0] sm:$0xff]
    %v893 = vld [vmem:[#allocation6 + $0xc8] sm:$0xff]
    %v894 = vld [vmem:[#allocation6 + $0xd0] sm:$0xff]
    %v895 = vld [vmem:[#allocation6 + $0xd8] sm:$0xff]
    %v896 = vld [vmem:[#allocation6 + $0xe0] sm:$0xff]
    %v897 = vld [vmem:[#allocation6 + $0xe8] sm:$0xff]
    %v898 = vld [vmem:[#allocation6 + $0xf0] sm:$0xff]
    %v899 = vld [vmem:[#allocation6 + $0xf8] sm:$0xff]
    %v900 = vld [vmem:[#allocation6 + $0x100] sm:$0xff]
    %v901 = vld [vmem:[#allocation6 + $0x108] sm:$0xff]
    %v902 = vld [vmem:[#allocation6 + $0x110] sm:$0xff]
    %v903 = vld [vmem:[#allocation6 + $0x118] sm:$0xff]
    %v904 = vld [vmem:[#allocation6 + $0x120] sm:$0xff]
    %v905 = vld [vmem:[#allocation6 + $0x128] sm:$0xff]
    %v906 = vld [vmem:[#allocation6 + $0x130] sm:$0xff]
    %v907 = vld [vmem:[#allocation6 + $0x138] sm:$0xff]
    %v908 = vld [vmem:[#allocation6 + $0x140] sm:$0xff]
    %v909 = vld [vmem:[#allocation6 + $0x148] sm:$0xff]
    %v910 = vld [vmem:[#allocation6 + $0x150] sm:$0xff]
    %v911 = vld [vmem:[#allocation6 + $0x158] sm:$0xff]
    %v912 = vld [vmem:[#allocation6 + $0x160] sm:$0xff]
    %v913 = vld [vmem:[#allocation6 + $0x168] sm:$0xff]
    %v914 = vld [vmem:[#allocation6 + $0x170] sm:$0xff]
    %v915 = vld [vmem:[#allocation6 + $0x178] sm:$0xff]
    %v916 = vld [vmem:[#allocation6 + $0x180] sm:$0xff]
    %v917 = vld [vmem:[#allocation6 + $0x188] sm:$0xff]
    %v918 = vld [vmem:[#allocation6 + $0x190] sm:$0xff]
    %v919 = vld [vmem:[#allocation6 + $0x198] sm:$0xff]
    %v920 = vld [vmem:[#allocation6 + $0x1a0] sm:$0xff]
    %v921 = vld [vmem:[#allocation6 + $0x1a8] sm:$0xff]
    %v922 = vld [vmem:[#allocation6 + $0x1b0] sm:$0xff]
    %v923 = vld [vmem:[#allocation6 + $0x1b8] sm:$0xff]
    %v924 = vld [vmem:[#allocation6 + $0x1c0] sm:$0xff]
    %v925 = vld [vmem:[#allocation6 + $0x1c8] sm:$0xff]
    %v926 = vld [vmem:[#allocation6 + $0x1d0] sm:$0xff]
    %v927 = vld [vmem:[#allocation6 + $0x1d8] sm:$0xff]
    %v928 = vld [vmem:[#allocation6 + $0x1e0] sm:$0xff]
    %v929 = vld [vmem:[#allocation6 + $0x1e8] sm:$0xff]
    %v930 = vld [vmem:[#allocation6 + $0x1f0] sm:$0xff]
    %v931 = vld [vmem:[#allocation6 + $0x1f8] sm:$0xff]
    %v932 = vld [vmem:[#allocation8] sm:$0xff]
    %v933 = vld [vmem:[#allocation8 + $0x8] sm:$0xff]
    %v934 = vld [vmem:[#allocation8 + $0x10] sm:$0xff]
    %v935 = vld [vmem:[#allocation8 + $0x18] sm:$0xff]
    %v936 = vld [vmem:[#allocation8 + $0x20] sm:$0xff]
    %v937 = vld [vmem:[#allocation8 + $0x28] sm:$0xff]
    %v938 = vld [vmem:[#allocation8 + $0x30] sm:$0xff]
    %v939 = vld [vmem:[#allocation8 + $0x38] sm:$0xff]
    %v940 = vld [vmem:[#allocation8 + $0x40] sm:$0xff]
    %v941 = vld [vmem:[#allocation8 + $0x48] sm:$0xff]
    %v942 = vld [vmem:[#allocation8 + $0x50] sm:$0xff]
    %v943 = vld [vmem:[#allocation8 + $0x58] sm:$0xff]
    %v944 = vld [vmem:[#allocation8 + $0x60] sm:$0xff]
    %v945 = vld [vmem:[#allocation8 + $0x68] sm:$0xff]
    %v946 = vld [vmem:[#allocation8 + $0x70] sm:$0xff]
    %v947 = vld [vmem:[#allocation8 + $0x78] sm:$0xff]
    %v948 = vld [vmem:[#allocation8 + $0x80] sm:$0xff]
    %v949 = vld [vmem:[#allocation8 + $0x88] sm:$0xff]
    %v950 = vld [vmem:[#allocation8 + $0x90] sm:$0xff]
    %v951 = vld [vmem:[#allocation8 + $0x98] sm:$0xff]
    %v952 = vld [vmem:[#allocation8 + $0xa0] sm:$0xff]
    %v953 = vld [vmem:[#allocation8 + $0xa8] sm:$0xff]
    %v954 = vld [vmem:[#allocation8 + $0xb0] sm:$0xff]
    %v955 = vld [vmem:[#allocation8 + $0xb8] sm:$0xff]
    %v956 = vld [vmem:[#allocation8 + $0xc0] sm:$0xff]
    %v957 = vld [vmem:[#allocation8 + $0xc8] sm:$0xff]
    %v958 = vld [vmem:[#allocation8 + $0xd0] sm:$0xff]
    %v959 = vld [vmem:[#allocation8 + $0xd8] sm:$0xff]
    %v960 = vld [vmem:[#allocation8 + $0xe0] sm:$0xff]
    %v961 = vld [vmem:[#allocation8 + $0xe8] sm:$0xff]
    %v962 = vld [vmem:[#allocation8 + $0xf0] sm:$0xff]
    %v963 = vld [vmem:[#allocation8 + $0xf8] sm:$0xff]
    %v964 = vld [vmem:[#allocation8 + $0x100] sm:$0xff]
    %v965 = vld [vmem:[#allocation8 + $0x108] sm:$0xff]
    %v966 = vld [vmem:[#allocation8 + $0x110] sm:$0xff]
    %v967 = vld [vmem:[#allocation8 + $0x118] sm:$0xff]
    %v968 = vld [vmem:[#allocation8 + $0x120] sm:$0xff]
    %v969 = vld [vmem:[#allocation8 + $0x128] sm:$0xff]
    %v970 = vld [vmem:[#allocation8 + $0x130] sm:$0xff]
    %v971 = vld [vmem:[#allocation8 + $0x138] sm:$0xff]
    %v972 = vld [vmem:[#allocation8 + $0x140] sm:$0xff]
    %v973 = vld [vmem:[#allocation8 + $0x148] sm:$0xff]
    %v974 = vld [vmem:[#allocation8 + $0x150] sm:$0xff]
    %v975 = vld [vmem:[#allocation8 + $0x158] sm:$0xff]
    %v976 = vld [vmem:[#allocation8 + $0x160] sm:$0xff]
    %v977 = vld [vmem:[#allocation8 + $0x168] sm:$0xff]
    %v978 = vld [vmem:[#allocation8 + $0x170] sm:$0xff]
    %v979 = vld [vmem:[#allocation8 + $0x178] sm:$0xff]
    %v980 = vld [vmem:[#allocation8 + $0x180] sm:$0xff]
    %v981 = vld [vmem:[#allocation8 + $0x188] sm:$0xff]
    %v982 = vld [vmem:[#allocation8 + $0x190] sm:$0xff]
    %v983 = vld [vmem:[#allocation8 + $0x198] sm:$0xff]
    %v984 = vld [vmem:[#allocation8 + $0x1a0] sm:$0xff]
    %v985 = vld [vmem:[#allocation8 + $0x1a8] sm:$0xff]
    %v986 = vld [vmem:[#allocation8 + $0x1b0] sm:$0xff]
    %v987 = vld [vmem:[#allocation8 + $0x1b8] sm:$0xff]
    %v988 = vld [vmem:[#allocation8 + $0x1c0] sm:$0xff]
    %v989 = vld [vmem:[#allocation8 + $0x1c8] sm:$0xff]
    %v990 = vld [vmem:[#allocation8 + $0x1d0] sm:$0xff]
    %v991 = vld [vmem:[#allocation8 + $0x1d8] sm:$0xff]
    %v992 = vld [vmem:[#allocation8 + $0x1e0] sm:$0xff]
    %v993 = vld [vmem:[#allocation8 + $0x1e8] sm:$0xff]
    %v994 = vld [vmem:[#allocation8 + $0x1f0] sm:$0xff]
    %v995 = vld [vmem:[#allocation8 + $0x1f8] sm:$0xff]
    %v996 = vld [vmem:[%s6] sm:$0xf]
    %v997 = vld [vmem:[#allocation3] sm:$0xff]
    %v998 = vld [vmem:[#allocation3 + $0x8] sm:$0xff]
    %v999 = vld [vmem:[#allocation3 + $0x10] sm:$0xff]
    %v1000 = vld [vmem:[#allocation3 + $0x18] sm:$0xff]
    %v1001 = vld [vmem:[#allocation3 + $0x20] sm:$0xff]
    %v1002 = vld [vmem:[#allocation3 + $0x28] sm:$0xff]
    %v1003 = vld [vmem:[#allocation3 + $0x30] sm:$0xff]
    %v1004 = vld [vmem:[#allocation3 + $0x38] sm:$0xff]
    %v1006 = vperm.slane %v996, 0
    %v1007 = vperm.slane %v996, 1
    %v1008 = vperm.slane %v996, 2
    %v1009 = vperm.slane %v996, 3
    %1014 = vmatpush.msra.mxu0 %v928
    %1015 = vmatpush.msra.mxu0 %v924
    %1016 = vmatpush.msra.mxu0 %v920
    %1017 = vmatpush.msra.mxu0 %v916
    %1018 = vmatpush.msra.mxu0 %v912
    %1019 = vmatpush.msra.mxu0 %v908
    %1020 = vmatpush.msra.mxu0 %v904
    %1021 = vmatpush.msra.mxu0 %v900
    %1022 = vmatpush.msra.mxu0 %v896
    %1023 = vmatpush.msra.mxu0 %v892
    %1024 = vmatpush.msra.mxu0 %v888
    %1025 = vmatpush.msra.mxu0 %v884
    %1026 = vmatpush.msra.mxu0 %v880
    %1027 = vmatpush.msra.mxu0 %v876
    %1028 = vmatpush.msra.mxu0 %v872
    %1029 = vmatpush.msra.mxu0 %v868
    %1030 = vmatmul.f32.gmra.mxu0 %v997
    %v1031 = vpop.f32.mrf.mxu0
    %v1032 = vadd.f32 %v1006, %v1031
    %1033 = vmatmul.f32.gmra.mxu0 %v998
    %v1034 = vpop.f32.mrf.mxu0
    %v1035 = vadd.f32 %v1006, %v1034
    %1036 = vmatmul.f32.gmra.mxu0 %v999
    %v1037 = vpop.f32.mrf.mxu0
    %v1038 = vadd.f32 %v1006, %v1037
    %1039 = vmatmul.f32.gmra.mxu0 %v1000
    %v1040 = vpop.f32.mrf.mxu0
    %v1041 = vadd.f32 %v1006, %v1040
    %1042 = vmatmul.f32.gmra.mxu0 %v1001
    %v1043 = vpop.f32.mrf.mxu0
    %v1044 = vadd.f32 %v1006, %v1043
    %1045 = vmatmul.f32.gmra.mxu0 %v1002
    %v1046 = vpop.f32.mrf.mxu0
    %v1047 = vadd.f32 %v1006, %v1046
    %1048 = vmatmul.f32.gmra.mxu0 %v1003
    %v1049 = vpop.f32.mrf.mxu0
    %v1050 = vadd.f32 %v1006, %v1049
    %1051 = vmatmul.f32.gmra.mxu0 %v1004
    %v1052 = vpop.f32.mrf.mxu0
    %v1053 = vadd.f32 %v1006, %v1052
    %1054 = vdwg.mxu0
    %1055 = vmatpush.msra.mxu0 %v929
    %1056 = vmatpush.msra.mxu0 %v925
    %1057 = vmatpush.msra.mxu0 %v921
    %1058 = vmatpush.msra.mxu0 %v917
    %1059 = vmatpush.msra.mxu0 %v913
    %1060 = vmatpush.msra.mxu0 %v909
    %1061 = vmatpush.msra.mxu0 %v905
    %1062 = vmatpush.msra.mxu0 %v901
    %1063 = vmatpush.msra.mxu0 %v897
    %1064 = vmatpush.msra.mxu0 %v893
    %1065 = vmatpush.msra.mxu0 %v889
    %1066 = vmatpush.msra.mxu0 %v885
    %1067 = vmatpush.msra.mxu0 %v881
    %1068 = vmatpush.msra.mxu0 %v877
    %1069 = vmatpush.msra.mxu0 %v873
    %1070 = vmatpush.msra.mxu0 %v869
    %1071 = vmatmul.f32.gmra.mxu0 %v997
    %v1072 = vpop.f32.mrf.mxu0
    %v1073 = vadd.f32 %v1007, %v1072
    %1074 = vmatmul.f32.gmra.mxu0 %v998
    %v1075 = vpop.f32.mrf.mxu0
    %v1076 = vadd.f32 %v1007, %v1075
    %1077 = vmatmul.f32.gmra.mxu0 %v999
    %v1078 = vpop.f32.mrf.mxu0
    %v1079 = vadd.f32 %v1007, %v1078
    %1080 = vmatmul.f32.gmra.mxu0 %v1000
    %v1081 = vpop.f32.mrf.mxu0
    %v1082 = vadd.f32 %v1007, %v1081
    %1083 = vmatmul.f32.gmra.mxu0 %v1001
    %v1084 = vpop.f32.mrf.mxu0
    %v1085 = vadd.f32 %v1007, %v1084
    %1086 = vmatmul.f32.gmra.mxu0 %v1002
    %v1087 = vpop.f32.mrf.mxu0
    %v1088 = vadd.f32 %v1007, %v1087
    %1089 = vmatmul.f32.gmra.mxu0 %v1003
    %v1090 = vpop.f32.mrf.mxu0
    %v1091 = vadd.f32 %v1007, %v1090
    %1092 = vmatmul.f32.gmra.mxu0 %v1004
    %v1093 = vpop.f32.mrf.mxu0
    %v1094 = vadd.f32 %v1007, %v1093
    %1095 = vdwg.mxu0
    %1096 = vmatpush.msra.mxu0 %v930
    %1097 = vmatpush.msra.mxu0 %v926
    %1098 = vmatpush.msra.mxu0 %v922
    %1099 = vmatpush.msra.mxu0 %v918
    %1100 = vmatpush.msra.mxu0 %v914
    %1101 = vmatpush.msra.mxu0 %v910
    %1102 = vmatpush.msra.mxu0 %v906
    %1103 = vmatpush.msra.mxu0 %v902
    %1104 = vmatpush.msra.mxu0 %v898
    %1105 = vmatpush.msra.mxu0 %v894
    %1106 = vmatpush.msra.mxu0 %v890
    %1107 = vmatpush.msra.mxu0 %v886
    %1108 = vmatpush.msra.mxu0 %v882
    %1109 = vmatpush.msra.mxu0 %v878
    %1110 = vmatpush.msra.mxu0 %v874
    %1111 = vmatpush.msra.mxu0 %v870
    %1112 = vmatmul.f32.gmra.mxu0 %v997
    %v1113 = vpop.f32.mrf.mxu0
    %v1114 = vadd.f32 %v1008, %v1113
    %1115 = vmatmul.f32.gmra.mxu0 %v998
    %v1116 = vpop.f32.mrf.mxu0
    %v1117 = vadd.f32 %v1008, %v1116
    %1118 = vmatmul.f32.gmra.mxu0 %v999
    %v1119 = vpop.f32.mrf.mxu0
    %v1120 = vadd.f32 %v1008, %v1119
    %1121 = vmatmul.f32.gmra.mxu0 %v1000
    %v1122 = vpop.f32.mrf.mxu0
    %v1123 = vadd.f32 %v1008, %v1122
    %1124 = vmatmul.f32.gmra.mxu0 %v1001
    %v1125 = vpop.f32.mrf.mxu0
    %v1126 = vadd.f32 %v1008, %v1125
    %1127 = vmatmul.f32.gmra.mxu0 %v1002
    %v1128 = vpop.f32.mrf.mxu0
    %v1129 = vadd.f32 %v1008, %v1128
    %1130 = vmatmul.f32.gmra.mxu0 %v1003
    %v1131 = vpop.f32.mrf.mxu0
    %v1132 = vadd.f32 %v1008, %v1131
    %1133 = vmatmul.f32.gmra.mxu0 %v1004
    %v1134 = vpop.f32.mrf.mxu0
    %v1135 = vadd.f32 %v1008, %v1134
    %1136 = vdwg.mxu0
    %1137 = vmatpush.msra.mxu0 %v931
    %1138 = vmatpush.msra.mxu0 %v927
    %1139 = vmatpush.msra.mxu0 %v923
    %1140 = vmatpush.msra.mxu0 %v919
    %1141 = vmatpush.msra.mxu0 %v915
    %1142 = vmatpush.msra.mxu0 %v911
    %1143 = vmatpush.msra.mxu0 %v907
    %1144 = vmatpush.msra.mxu0 %v903
    %1145 = vmatpush.msra.mxu0 %v899
    %1146 = vmatpush.msra.mxu0 %v895
    %1147 = vmatpush.msra.mxu0 %v891
    %1148 = vmatpush.msra.mxu0 %v887
    %1149 = vmatpush.msra.mxu0 %v883
    %1150 = vmatpush.msra.mxu0 %v879
    %1151 = vmatpush.msra.mxu0 %v875
    %1152 = vmatpush.msra.mxu0 %v871
    %1153 = vmatmul.f32.gmra.mxu0 %v997
    %v1154 = vpop.f32.mrf.mxu0
    %v1155 = vadd.f32 %v1009, %v1154
    %1156 = vmatmul.f32.gmra.mxu0 %v998
    %v1157 = vpop.f32.mrf.mxu0
    %v1158 = vadd.f32 %v1009, %v1157
    %1159 = vmatmul.f32.gmra.mxu0 %v999
    %v1160 = vpop.f32.mrf.mxu0
    %v1161 = vadd.f32 %v1009, %v1160
    %1162 = vmatmul.f32.gmra.mxu0 %v1000
    %v1163 = vpop.f32.mrf.mxu0
    %v1164 = vadd.f32 %v1009, %v1163
    %1165 = vmatmul.f32.gmra.mxu0 %v1001
    %v1166 = vpop.f32.mrf.mxu0
    %v1167 = vadd.f32 %v1009, %v1166
    %1168 = vmatmul.f32.gmra.mxu0 %v1002
    %v1169 = vpop.f32.mrf.mxu0
    %v1170 = vadd.f32 %v1009, %v1169
    %1171 = vmatmul.f32.gmra.mxu0 %v1003
    %v1172 = vpop.f32.mrf.mxu0
    %v1173 = vadd.f32 %v1009, %v1172
    %1174 = vmatmul.f32.gmra.mxu0 %v1004
    %v1175 = vpop.f32.mrf.mxu0
    %v1176 = vadd.f32 %v1009, %v1175
    %1177 = vdwg.mxu0
    %1178 = vst [vmem:[#allocation2] sm:$0xff] %v1032
    %1179 = vst [vmem:[#allocation2 + $0x8] sm:$0xff] %v1073
    %1180 = vst [vmem:[#allocation2 + $0x10] sm:$0xff] %v1114
    %1181 = vst [vmem:[#allocation2 + $0x18] sm:$0xff] %v1155
    %1182 = vst [vmem:[#allocation2 + $0x20] sm:$0xff] %v1035
    %1183 = vst [vmem:[#allocation2 + $0x28] sm:$0xff] %v1076
    %1184 = vst [vmem:[#allocation2 + $0x30] sm:$0xff] %v1117
    %1185 = vst [vmem:[#allocation2 + $0x38] sm:$0xff] %v1158
    %1186 = vst [vmem:[#allocation2 + $0x40] sm:$0xff] %v1038
    %1187 = vst [vmem:[#allocation2 + $0x48] sm:$0xff] %v1079
    %1188 = vst [vmem:[#allocation2 + $0x50] sm:$0xff] %v1120
    %1189 = vst [vmem:[#allocation2 + $0x58] sm:$0xff] %v1161
    %1190 = vst [vmem:[#allocation2 + $0x60] sm:$0xff] %v1041
    %1191 = vst [vmem:[#allocation2 + $0x68] sm:$0xff] %v1082
    %1192 = vst [vmem:[#allocation2 + $0x70] sm:$0xff] %v1123
    %1193 = vst [vmem:[#allocation2 + $0x78] sm:$0xff] %v1164
    %1194 = vst [vmem:[#allocation2 + $0x80] sm:$0xff] %v1044
    %1195 = vst [vmem:[#allocation2 + $0x88] sm:$0xff] %v1085
    %1196 = vst [vmem:[#allocation2 + $0x90] sm:$0xff] %v1126
    %1197 = vst [vmem:[#allocation2 + $0x98] sm:$0xff] %v1167
    %1198 = vst [vmem:[#allocation2 + $0xa0] sm:$0xff] %v1047
    %1199 = vst [vmem:[#allocation2 + $0xa8] sm:$0xff] %v1088
    %1200 = vst [vmem:[#allocation2 + $0xb0] sm:$0xff] %v1129
    %1201 = vst [vmem:[#allocation2 + $0xb8] sm:$0xff] %v1170
    %1202 = vst [vmem:[#allocation2 + $0xc0] sm:$0xff] %v1050
    %1203 = vst [vmem:[#allocation2 + $0xc8] sm:$0xff] %v1091
    %1204 = vst [vmem:[#allocation2 + $0xd0] sm:$0xff] %v1132
    %1205 = vst [vmem:[#allocation2 + $0xd8] sm:$0xff] %v1173
    %1206 = vst [vmem:[#allocation2 + $0xe0] sm:$0xff] %v1053
    %1207 = vst [vmem:[#allocation2 + $0xe8] sm:$0xff] %v1094
    %1208 = vst [vmem:[#allocation2 + $0xf0] sm:$0xff] %v1135
    %1209 = vst [vmem:[#allocation2 + $0xf8] sm:$0xff] %v1176
    loop: start=0, step=1, limit=2
    $region65: #{lstm_forward.1} parent=1 // loop_pre_header
      _
    $region66: #{lstm_forward.1} parent=1 // loop_header
      %s1211 = sphi 0, %s1215
      %p1212 = scmp.ge.s32.totalorder %s1211, 2
      %v1216 = vphi 0.0, %v1657
      %v1217 = vphi 0.0, %v1655
    $region67: #{lstm_forward.1} parent=1 // loop_header_branch
      %1214 = sbr.rel (%p1212) target = $region71
    $region68: #{lstm_forward.1} parent=1 // loop_body
      %s1218 = smul.u32 %s1211, 4
      %s1219 = smul.u32 %s1218, 4
      %s1220 = smul.addr %s1219, 8
      %s1221 = scalar_lea.vmem [#allocation2], %s1220
      %v1222 = vld [vmem:[%s1221] sm:$0xff]
      %v1223 = vld [vmem:[%s1221 + $0x8] sm:$0xff]
      %v1224 = vld [vmem:[%s1221 + $0x10] sm:$0xff]
      %v1225 = vld [vmem:[%s1221 + $0x18] sm:$0xff]
      %1226 = vmatpush.msra.mxu0 %v992
      %1227 = vmatpush.msra.mxu0 %v988
      %1228 = vmatpush.msra.mxu0 %v984
      %1229 = vmatpush.msra.mxu0 %v980
      %1230 = vmatpush.msra.mxu0 %v976
      %1231 = vmatpush.msra.mxu0 %v972
      %1232 = vmatpush.msra.mxu0 %v968
      %1233 = vmatpush.msra.mxu0 %v964
      %1234 = vmatpush.msra.mxu0 %v960
      %1235 = vmatpush.msra.mxu0 %v956
      %1236 = vmatpush.msra.mxu0 %v952
      %1237 = vmatpush.msra.mxu0 %v948
      %1238 = vmatpush.msra.mxu0 %v944
      %1239 = vmatpush.msra.mxu0 %v940
      %1240 = vmatpush.msra.mxu0 %v936
      %1241 = vmatpush.msra.mxu0 %v932
      %1242 = vmatmul.f32.gmra.mxu0 %v1216
      %v1243 = vpop.f32.mrf.mxu0
      %v1244 = vadd.f32 0.0, %v1243
      %1245 = vdwg.mxu0
      %1246 = vmatpush.msra.mxu0 %v993
      %1247 = vmatpush.msra.mxu0 %v989
      %1248 = vmatpush.msra.mxu0 %v985
      %1249 = vmatpush.msra.mxu0 %v981
      %1250 = vmatpush.msra.mxu0 %v977
      %1251 = vmatpush.msra.mxu0 %v973
      %1252 = vmatpush.msra.mxu0 %v969
      %1253 = vmatpush.msra.mxu0 %v965
      %1254 = vmatpush.msra.mxu0 %v961
      %1255 = vmatpush.msra.mxu0 %v957
      %1256 = vmatpush.msra.mxu0 %v953
      %1257 = vmatpush.msra.mxu0 %v949
      %1258 = vmatpush.msra.mxu0 %v945
      %1259 = vmatpush.msra.mxu0 %v941
      %1260 = vmatpush.msra.mxu0 %v937
      %1261 = vmatpush.msra.mxu0 %v933
      %1262 = vmatmul.f32.gmra.mxu0 %v1216
      %v1263 = vpop.f32.mrf.mxu0
      %v1264 = vadd.f32 0.0, %v1263
      %1265 = vdwg.mxu0
      %1266 = vmatpush.msra.mxu0 %v994
      %1267 = vmatpush.msra.mxu0 %v990
      %1268 = vmatpush.msra.mxu0 %v986
      %1269 = vmatpush.msra.mxu0 %v982
      %1270 = vmatpush.msra.mxu0 %v978
      %1271 = vmatpush.msra.mxu0 %v974
      %1272 = vmatpush.msra.mxu0 %v970
      %1273 = vmatpush.msra.mxu0 %v966
      %1274 = vmatpush.msra.mxu0 %v962
      %1275 = vmatpush.msra.mxu0 %v958
      %1276 = vmatpush.msra.mxu0 %v954
      %1277 = vmatpush.msra.mxu0 %v950
      %1278 = vmatpush.msra.mxu0 %v946
      %1279 = vmatpush.msra.mxu0 %v942
      %1280 = vmatpush.msra.mxu0 %v938
      %1281 = vmatpush.msra.mxu0 %v934
      %1282 = vmatmul.f32.gmra.mxu0 %v1216
      %v1283 = vpop.f32.mrf.mxu0
      %v1284 = vadd.f32 0.0, %v1283
      %1285 = vdwg.mxu0
      %1286 = vmatpush.msra.mxu0 %v995
      %1287 = vmatpush.msra.mxu0 %v991
      %1288 = vmatpush.msra.mxu0 %v987
      %1289 = vmatpush.msra.mxu0 %v983
      %1290 = vmatpush.msra.mxu0 %v979
      %1291 = vmatpush.msra.mxu0 %v975
      %1292 = vmatpush.msra.mxu0 %v971
      %1293 = vmatpush.msra.mxu0 %v967
      %1294 = vmatpush.msra.mxu0 %v963
      %1295 = vmatpush.msra.mxu0 %v959
      %1296 = vmatpush.msra.mxu0 %v955
      %1297 = vmatpush.msra.mxu0 %v951
      %1298 = vmatpush.msra.mxu0 %v947
      %1299 = vmatpush.msra.mxu0 %v943
      %1300 = vmatpush.msra.mxu0 %v939
      %1301 = vmatpush.msra.mxu0 %v935
      %1302 = vmatmul.f32.gmra.mxu0 %v1216
      %v1303 = vpop.f32.mrf.mxu0
      %v1304 = vadd.f32 0.0, %v1303
      %1305 = vdwg.mxu0
      %v1306 = vadd.f32 %v1222, %v1244
      %v1307 = vadd.f32 %v1223, %v1264
      %v1308 = vadd.f32 %v1224, %v1284
      %v1309 = vadd.f32 %v1225, %v1304
      %v1310 = vmul.f32 %v1306, 0.5
      %v1311 = vmul.f32 %v1307, 0.5
      %v1312 = vmul.f32 %v1308, 0.5
      %v1313 = vtanh.pop %v1310
      %v1314 = vtanh.pop %v1311
      %v1315 = vtanh.pop %v1312
      %v1316 = vadd.f32 %v1313, 1.0
      %v1317 = vadd.f32 %v1314, 1.0
      %v1318 = vadd.f32 %v1315, 1.0
      %v1319 = vmul.f32 %v1316, 0.5
      %v1320 = vmul.f32 %v1317, 0.5
      %v1321 = vmul.f32 %v1318, 0.5
      %v1322 = vtanh.pop %v1309
      %v1323 = vmul.f32 %v1320, %v1217
      %v1324 = vmul.f32 %v1319, %v1322
      %v1325 = vadd.f32 %v1323, %v1324
      %v1326 = vtanh.pop %v1325
      %v1327 = vmul.f32 %v1321, %v1326
      %s1328 = sadd.s32 %s1218, 1
      %s1329 = smul.u32 %s1328, 4
      %s1330 = smul.addr %s1329, 8
      %s1331 = scalar_lea.vmem [#allocation2], %s1330
      %v1332 = vld [vmem:[%s1331] sm:$0xff]
      %v1333 = vld [vmem:[%s1331 + $0x8] sm:$0xff]
      %v1334 = vld [vmem:[%s1331 + $0x10] sm:$0xff]
      %v1335 = vld [vmem:[%s1331 + $0x18] sm:$0xff]
      %1336 = vmatpush.msra.mxu0 %v992
      %1337 = vmatpush.msra.mxu0 %v988
      %1338 = vmatpush.msra.mxu0 %v984
      %1339 = vmatpush.msra.mxu0 %v980
      %1340 = vmatpush.msra.mxu0 %v976
      %1341 = vmatpush.msra.mxu0 %v972
      %1342 = vmatpush.msra.mxu0 %v968
      %1343 = vmatpush.msra.mxu0 %v964
      %1344 = vmatpush.msra.mxu0 %v960
      %1345 = vmatpush.msra.mxu0 %v956
      %1346 = vmatpush.msra.mxu0 %v952
      %1347 = vmatpush.msra.mxu0 %v948
      %1348 = vmatpush.msra.mxu0 %v944
      %1349 = vmatpush.msra.mxu0 %v940
      %1350 = vmatpush.msra.mxu0 %v936
      %1351 = vmatpush.msra.mxu0 %v932
      %1352 = vmatmul.f32.gmra.mxu0 %v1327
      %v1353 = vpop.f32.mrf.mxu0
      %v1354 = vadd.f32 0.0, %v1353
      %1355 = vdwg.mxu0
      %1356 = vmatpush.msra.mxu0 %v993
      %1357 = vmatpush.msra.mxu0 %v989
      %1358 = vmatpush.msra.mxu0 %v985
      %1359 = vmatpush.msra.mxu0 %v981
      %1360 = vmatpush.msra.mxu0 %v977
      %1361 = vmatpush.msra.mxu0 %v973
      %1362 = vmatpush.msra.mxu0 %v969
      %1363 = vmatpush.msra.mxu0 %v965
      %1364 = vmatpush.msra.mxu0 %v961
      %1365 = vmatpush.msra.mxu0 %v957
      %1366 = vmatpush.msra.mxu0 %v953
      %1367 = vmatpush.msra.mxu0 %v949
      %1368 = vmatpush.msra.mxu0 %v945
      %1369 = vmatpush.msra.mxu0 %v941
      %1370 = vmatpush.msra.mxu0 %v937
      %1371 = vmatpush.msra.mxu0 %v933
      %1372 = vmatmul.f32.gmra.mxu0 %v1327
      %v1373 = vpop.f32.mrf.mxu0
      %v1374 = vadd.f32 0.0, %v1373
      %1375 = vdwg.mxu0
      %1376 = vmatpush.msra.mxu0 %v994
      %1377 = vmatpush.msra.mxu0 %v990
      %1378 = vmatpush.msra.mxu0 %v986
      %1379 = vmatpush.msra.mxu0 %v982
      %1380 = vmatpush.msra.mxu0 %v978
      %1381 = vmatpush.msra.mxu0 %v974
      %1382 = vmatpush.msra.mxu0 %v970
      %1383 = vmatpush.msra.mxu0 %v966
      %1384 = vmatpush.msra.mxu0 %v962
      %1385 = vmatpush.msra.mxu0 %v958
      %1386 = vmatpush.msra.mxu0 %v954
      %1387 = vmatpush.msra.mxu0 %v950
      %1388 = vmatpush.msra.mxu0 %v946
      %1389 = vmatpush.msra.mxu0 %v942
      %1390 = vmatpush.msra.mxu0 %v938
      %1391 = vmatpush.msra.mxu0 %v934
      %1392 = vmatmul.f32.gmra.mxu0 %v1327
      %v1393 = vpop.f32.mrf.mxu0
      %v1394 = vadd.f32 0.0, %v1393
      %1395 = vdwg.mxu0
      %1396 = vmatpush.msra.mxu0 %v995
      %1397 = vmatpush.msra.mxu0 %v991
      %1398 = vmatpush.msra.mxu0 %v987
      %1399 = vmatpush.msra.mxu0 %v983
      %1400 = vmatpush.msra.mxu0 %v979
      %1401 = vmatpush.msra.mxu0 %v975
      %1402 = vmatpush.msra.mxu0 %v971
      %1403 = vmatpush.msra.mxu0 %v967
      %1404 = vmatpush.msra.mxu0 %v963
      %1405 = vmatpush.msra.mxu0 %v959
      %1406 = vmatpush.msra.mxu0 %v955
      %1407 = vmatpush.msra.mxu0 %v951
      %1408 = vmatpush.msra.mxu0 %v947
      %1409 = vmatpush.msra.mxu0 %v943
      %1410 = vmatpush.msra.mxu0 %v939
      %1411 = vmatpush.msra.mxu0 %v935
      %1412 = vmatmul.f32.gmra.mxu0 %v1327
      %v1413 = vpop.f32.mrf.mxu0
      %v1414 = vadd.f32 0.0, %v1413
      %1415 = vdwg.mxu0
      %v1416 = vadd.f32 %v1332, %v1354
      %v1417 = vadd.f32 %v1333, %v1374
      %v1418 = vadd.f32 %v1334, %v1394
      %v1419 = vadd.f32 %v1335, %v1414
      %v1420 = vmul.f32 %v1416, 0.5
      %v1421 = vmul.f32 %v1417, 0.5
      %v1422 = vmul.f32 %v1418, 0.5
      %v1423 = vtanh.pop %v1420
      %v1424 = vtanh.pop %v1421
      %v1425 = vtanh.pop %v1422
      %v1426 = vadd.f32 %v1423, 1.0
      %v1427 = vadd.f32 %v1424, 1.0
      %v1428 = vadd.f32 %v1425, 1.0
      %v1429 = vmul.f32 %v1426, 0.5
      %v1430 = vmul.f32 %v1427, 0.5
      %v1431 = vmul.f32 %v1428, 0.5
      %v1432 = vtanh.pop %v1419
      %v1433 = vmul.f32 %v1430, %v1325
      %v1434 = vmul.f32 %v1429, %v1432
      %v1435 = vadd.f32 %v1433, %v1434
      %v1436 = vtanh.pop %v1435
      %v1437 = vmul.f32 %v1431, %v1436
      %s1438 = sadd.s32 %s1218, 2
      %s1439 = smul.u32 %s1438, 4
      %s1440 = smul.addr %s1439, 8
      %s1441 = scalar_lea.vmem [#allocation2], %s1440
      %v1442 = vld [vmem:[%s1441] sm:$0xff]
      %v1443 = vld [vmem:[%s1441 + $0x8] sm:$0xff]
      %v1444 = vld [vmem:[%s1441 + $0x10] sm:$0xff]
      %v1445 = vld [vmem:[%s1441 + $0x18] sm:$0xff]
      %1446 = vmatpush.msra.mxu0 %v992
      %1447 = vmatpush.msra.mxu0 %v988
      %1448 = vmatpush.msra.mxu0 %v984
      %1449 = vmatpush.msra.mxu0 %v980
      %1450 = vmatpush.msra.mxu0 %v976
      %1451 = vmatpush.msra.mxu0 %v972
      %1452 = vmatpush.msra.mxu0 %v968
      %1453 = vmatpush.msra.mxu0 %v964
      %1454 = vmatpush.msra.mxu0 %v960
      %1455 = vmatpush.msra.mxu0 %v956
      %1456 = vmatpush.msra.mxu0 %v952
      %1457 = vmatpush.msra.mxu0 %v948
      %1458 = vmatpush.msra.mxu0 %v944
      %1459 = vmatpush.msra.mxu0 %v940
      %1460 = vmatpush.msra.mxu0 %v936
      %1461 = vmatpush.msra.mxu0 %v932
      %1462 = vmatmul.f32.gmra.mxu0 %v1437
      %v1463 = vpop.f32.mrf.mxu0
      %v1464 = vadd.f32 0.0, %v1463
      %1465 = vdwg.mxu0
      %1466 = vmatpush.msra.mxu0 %v993
      %1467 = vmatpush.msra.mxu0 %v989
      %1468 = vmatpush.msra.mxu0 %v985
      %1469 = vmatpush.msra.mxu0 %v981
      %1470 = vmatpush.msra.mxu0 %v977
      %1471 = vmatpush.msra.mxu0 %v973
      %1472 = vmatpush.msra.mxu0 %v969
      %1473 = vmatpush.msra.mxu0 %v965
      %1474 = vmatpush.msra.mxu0 %v961
      %1475 = vmatpush.msra.mxu0 %v957
      %1476 = vmatpush.msra.mxu0 %v953
      %1477 = vmatpush.msra.mxu0 %v949
      %1478 = vmatpush.msra.mxu0 %v945
      %1479 = vmatpush.msra.mxu0 %v941
      %1480 = vmatpush.msra.mxu0 %v937
      %1481 = vmatpush.msra.mxu0 %v933
      %1482 = vmatmul.f32.gmra.mxu0 %v1437
      %v1483 = vpop.f32.mrf.mxu0
      %v1484 = vadd.f32 0.0, %v1483
      %1485 = vdwg.mxu0
      %1486 = vmatpush.msra.mxu0 %v994
      %1487 = vmatpush.msra.mxu0 %v990
      %1488 = vmatpush.msra.mxu0 %v986
      %1489 = vmatpush.msra.mxu0 %v982
      %1490 = vmatpush.msra.mxu0 %v978
      %1491 = vmatpush.msra.mxu0 %v974
      %1492 = vmatpush.msra.mxu0 %v970
      %1493 = vmatpush.msra.mxu0 %v966
      %1494 = vmatpush.msra.mxu0 %v962
      %1495 = vmatpush.msra.mxu0 %v958
      %1496 = vmatpush.msra.mxu0 %v954
      %1497 = vmatpush.msra.mxu0 %v950
      %1498 = vmatpush.msra.mxu0 %v946
      %1499 = vmatpush.msra.mxu0 %v942
      %1500 = vmatpush.msra.mxu0 %v938
      %1501 = vmatpush.msra.mxu0 %v934
      %1502 = vmatmul.f32.gmra.mxu0 %v1437
      %v1503 = vpop.f32.mrf.mxu0
      %v1504 = vadd.f32 0.0, %v1503
      %1505 = vdwg.mxu0
      %1506 = vmatpush.msra.mxu0 %v995
      %1507 = vmatpush.msra.mxu0 %v991
      %1508 = vmatpush.msra.mxu0 %v987
      %1509 = vmatpush.msra.mxu0 %v983
      %1510 = vmatpush.msra.mxu0 %v979
      %1511 = vmatpush.msra.mxu0 %v975
      %1512 = vmatpush.msra.mxu0 %v971
      %1513 = vmatpush.msra.mxu0 %v967
      %1514 = vmatpush.msra.mxu0 %v963
      %1515 = vmatpush.msra.mxu0 %v959
      %1516 = vmatpush.msra.mxu0 %v955
      %1517 = vmatpush.msra.mxu0 %v951
      %1518 = vmatpush.msra.mxu0 %v947
      %1519 = vmatpush.msra.mxu0 %v943
      %1520 = vmatpush.msra.mxu0 %v939
      %1521 = vmatpush.msra.mxu0 %v935
      %1522 = vmatmul.f32.gmra.mxu0 %v1437
      %v1523 = vpop.f32.mrf.mxu0
      %v1524 = vadd.f32 0.0, %v1523
      %1525 = vdwg.mxu0
      %v1526 = vadd.f32 %v1442, %v1464
      %v1527 = vadd.f32 %v1443, %v1484
      %v1528 = vadd.f32 %v1444, %v1504
      %v1529 = vadd.f32 %v1445, %v1524
      %v1530 = vmul.f32 %v1526, 0.5
      %v1531 = vmul.f32 %v1527, 0.5
      %v1532 = vmul.f32 %v1528, 0.5
      %v1533 = vtanh.pop %v1530
      %v1534 = vtanh.pop %v1531
      %v1535 = vtanh.pop %v1532
      %v1536 = vadd.f32 %v1533, 1.0
      %v1537 = vadd.f32 %v1534, 1.0
      %v1538 = vadd.f32 %v1535, 1.0
      %v1539 = vmul.f32 %v1536, 0.5
      %v1540 = vmul.f32 %v1537, 0.5
      %v1541 = vmul.f32 %v1538, 0.5
      %v1542 = vtanh.pop %v1529
      %v1543 = vmul.f32 %v1540, %v1435
      %v1544 = vmul.f32 %v1539, %v1542
      %v1545 = vadd.f32 %v1543, %v1544
      %v1546 = vtanh.pop %v1545
      %v1547 = vmul.f32 %v1541, %v1546
      %s1548 = sadd.s32 %s1218, 3
      %s1549 = smul.u32 %s1548, 4
      %s1550 = smul.addr %s1549, 8
      %s1551 = scalar_lea.vmem [#allocation2], %s1550
      %v1552 = vld [vmem:[%s1551] sm:$0xff]
      %v1553 = vld [vmem:[%s1551 + $0x8] sm:$0xff]
      %v1554 = vld [vmem:[%s1551 + $0x10] sm:$0xff]
      %v1555 = vld [vmem:[%s1551 + $0x18] sm:$0xff]
      %1556 = vmatpush.msra.mxu0 %v992
      %1557 = vmatpush.msra.mxu0 %v988
      %1558 = vmatpush.msra.mxu0 %v984
      %1559 = vmatpush.msra.mxu0 %v980
      %1560 = vmatpush.msra.mxu0 %v976
      %1561 = vmatpush.msra.mxu0 %v972
      %1562 = vmatpush.msra.mxu0 %v968
      %1563 = vmatpush.msra.mxu0 %v964
      %1564 = vmatpush.msra.mxu0 %v960
      %1565 = vmatpush.msra.mxu0 %v956
      %1566 = vmatpush.msra.mxu0 %v952
      %1567 = vmatpush.msra.mxu0 %v948
      %1568 = vmatpush.msra.mxu0 %v944
      %1569 = vmatpush.msra.mxu0 %v940
      %1570 = vmatpush.msra.mxu0 %v936
      %1571 = vmatpush.msra.mxu0 %v932
      %1572 = vmatmul.f32.gmra.mxu0 %v1547
      %v1573 = vpop.f32.mrf.mxu0
      %v1574 = vadd.f32 0.0, %v1573
      %1575 = vdwg.mxu0
      %1576 = vmatpush.msra.mxu0 %v993
      %1577 = vmatpush.msra.mxu0 %v989
      %1578 = vmatpush.msra.mxu0 %v985
      %1579 = vmatpush.msra.mxu0 %v981
      %1580 = vmatpush.msra.mxu0 %v977
      %1581 = vmatpush.msra.mxu0 %v973
      %1582 = vmatpush.msra.mxu0 %v969
      %1583 = vmatpush.msra.mxu0 %v965
      %1584 = vmatpush.msra.mxu0 %v961
      %1585 = vmatpush.msra.mxu0 %v957
      %1586 = vmatpush.msra.mxu0 %v953
      %1587 = vmatpush.msra.mxu0 %v949
      %1588 = vmatpush.msra.mxu0 %v945
      %1589 = vmatpush.msra.mxu0 %v941
      %1590 = vmatpush.msra.mxu0 %v937
      %1591 = vmatpush.msra.mxu0 %v933
      %1592 = vmatmul.f32.gmra.mxu0 %v1547
      %v1593 = vpop.f32.mrf.mxu0
      %v1594 = vadd.f32 0.0, %v1593
      %1595 = vdwg.mxu0
      %1596 = vmatpush.msra.mxu0 %v994
      %1597 = vmatpush.msra.mxu0 %v990
      %1598 = vmatpush.msra.mxu0 %v986
      %1599 = vmatpush.msra.mxu0 %v982
      %1600 = vmatpush.msra.mxu0 %v978
      %1601 = vmatpush.msra.mxu0 %v974
      %1602 = vmatpush.msra.mxu0 %v970
      %1603 = vmatpush.msra.mxu0 %v966
      %1604 = vmatpush.msra.mxu0 %v962
      %1605 = vmatpush.msra.mxu0 %v958
      %1606 = vmatpush.msra.mxu0 %v954
      %1607 = vmatpush.msra.mxu0 %v950
      %1608 = vmatpush.msra.mxu0 %v946
      %1609 = vmatpush.msra.mxu0 %v942
      %1610 = vmatpush.msra.mxu0 %v938
      %1611 = vmatpush.msra.mxu0 %v934
      %1612 = vmatmul.f32.gmra.mxu0 %v1547
      %v1613 = vpop.f32.mrf.mxu0
      %v1614 = vadd.f32 0.0, %v1613
      %1615 = vdwg.mxu0
      %1616 = vmatpush.msra.mxu0 %v995
      %1617 = vmatpush.msra.mxu0 %v991
      %1618 = vmatpush.msra.mxu0 %v987
      %1619 = vmatpush.msra.mxu0 %v983
      %1620 = vmatpush.msra.mxu0 %v979
      %1621 = vmatpush.msra.mxu0 %v975
      %1622 = vmatpush.msra.mxu0 %v971
      %1623 = vmatpush.msra.mxu0 %v967
      %1624 = vmatpush.msra.mxu0 %v963
      %1625 = vmatpush.msra.mxu0 %v959
      %1626 = vmatpush.msra.mxu0 %v955
      %1627 = vmatpush.msra.mxu0 %v951
      %1628 = vmatpush.msra.mxu0 %v947
      %1629 = vmatpush.msra.mxu0 %v943
      %1630 = vmatpush.msra.mxu0 %v939
      %1631 = vmatpush.msra.mxu0 %v935
      %1632 = vmatmul.f32.gmra.mxu0 %v1547
      %v1633 = vpop.f32.mrf.mxu0
      %v1634 = vadd.f32 0.0, %v1633
      %1635 = vdwg.mxu0
      %v1636 = vadd.f32 %v1552, %v1574
      %v1637 = vadd.f32 %v1553, %v1594
      %v1638 = vadd.f32 %v1554, %v1614
      %v1639 = vadd.f32 %v1555, %v1634
      %v1640 = vmul.f32 %v1636, 0.5
      %v1641 = vmul.f32 %v1637, 0.5
      %v1642 = vmul.f32 %v1638, 0.5
      %v1643 = vtanh.pop %v1640
      %v1644 = vtanh.pop %v1641
      %v1645 = vtanh.pop %v1642
      %v1646 = vadd.f32 %v1643, 1.0
      %v1647 = vadd.f32 %v1644, 1.0
      %v1648 = vadd.f32 %v1645, 1.0
      %v1649 = vmul.f32 %v1646, 0.5
      %v1650 = vmul.f32 %v1647, 0.5
      %v1651 = vmul.f32 %v1648, 0.5
      %v1652 = vtanh.pop %v1639
      %v1653 = vmul.f32 %v1650, %v1545
      %v1654 = vmul.f32 %v1649, %v1652
      %v1655 = vadd.f32 %v1653, %v1654
      %v1656 = vtanh.pop %v1655
      %v1657 = vmul.f32 %v1651, %v1656
    $region69: #{lstm_forward.1} parent=1 // loop_footer
      %s1215 = sadd.s32 1, %s1211
    $region70: #{lstm_forward.1} parent=1 // loop_footer_branch
      %1210 = sbr.rel target = $region66
    $region71: #{lstm_forward.1} parent=1 // loop_exit
      _
    %v1658 = vld [vmem:[%s7] sm:$0xff]
    %v1659 = vld [vmem:[%s7 + $0x8] sm:$0xff]
    %v1660 = vld [vmem:[%s7 + $0x10] sm:$0xff]
    %v1661 = vld [vmem:[%s7 + $0x18] sm:$0xff]
    %v1662 = vld [vmem:[%s7 + $0x20] sm:$0xff]
    %v1663 = vld [vmem:[%s7 + $0x28] sm:$0xff]
    %v1664 = vld [vmem:[%s7 + $0x30] sm:$0xff]
    %v1665 = vld [vmem:[%s7 + $0x38] sm:$0xff]
    %v1666 = vld [vmem:[%s7 + $0x40] sm:$0xff]
    %v1667 = vld [vmem:[%s7 + $0x48] sm:$0xff]
    %v1668 = vld [vmem:[%s7 + $0x50] sm:$0xff]
    %v1669 = vld [vmem:[%s7 + $0x58] sm:$0xff]
    %v1670 = vld [vmem:[%s7 + $0x60] sm:$0xff]
    %v1671 = vld [vmem:[%s7 + $0x68] sm:$0xff]
    %v1672 = vld [vmem:[%s7 + $0x70] sm:$0xff]
    %v1673 = vld [vmem:[%s7 + $0x78] sm:$0xff]
    %v1674 = vld [vmem:[%s8] sm:$0x1]
    %v1676 = vperm.slane %v1674, 0
    %1678 = vmatpush.msra.mxu0 %v1673
    %1679 = vmatpush.msra.mxu0 %v1672
    %1680 = vmatpush.msra.mxu0 %v1671
    %1681 = vmatpush.msra.mxu0 %v1670
    %1682 = vmatpush.msra.mxu0 %v1669
    %1683 = vmatpush.msra.mxu0 %v1668
    %1684 = vmatpush.msra.mxu0 %v1667
    %1685 = vmatpush.msra.mxu0 %v1666
    %1686 = vmatpush.msra.mxu0 %v1665
    %1687 = vmatpush.msra.mxu0 %v1664
    %1688 = vmatpush.msra.mxu0 %v1663
    %1689 = vmatpush.msra.mxu0 %v1662
    %1690 = vmatpush.msra.mxu0 %v1661
    %1691 = vmatpush.msra.mxu0 %v1660
    %1692 = vmatpush.msra.mxu0 %v1659
    %1693 = vmatpush.msra.mxu0 %v1658
    %1694 = vmatmul.f32.gmra.mxu0 %v1216
    %v1695 = vpop.f32.mrf.mxu0
    %v1696 = vadd.f32 %v1676, %v1695
    %1697 = vdwg.mxu0
    %v1698 = vld [vmem:[%s9] sm:$0x1]
    %v1699 = vld [vmem:[%s10] sm:$0x1]
    %v1700 = vsel %vm178, %v1696, 0.0
    %1701 = vadd.xlane.f32.xlu0 %v1700
    %v1702 = vpop.xlane.xlu0 %1701
    %v1703 = vrcp.pop 4.0
    %v1704 = vmul.f32 4.0, %v1703
    %v1705 = vsub.f32 1.0, %v1704
    %v1706 = vmul.f32 %v1703, %v1705
    %v1707 = vadd.f32 %v1703, %v1706
    %vm1708 = vweird.f32 %v1703
    %v1709 = vsel %vm1708, %v1703, %v1707
    %v1710 = vmul.f32 %v1702, %v1709
    %v1711 = vsub.f32 %v1696, %v1710
    %v1712 = vmul.f32 %v1711, %v1711
    %v1713 = vsel %vm178, %v1712, 0.0
    %1714 = vadd.xlane.f32.xlu0 %v1713
    %v1715 = vpop.xlane.xlu0 %1714
    %v1716 = vmul.f32 %v1715, %v1709
    %v1717 = vadd.f32 %v1716, 1e-05
    %v1718 = vrsqrt.pop %v1717
    %v1719 = vmul.f32 %v1718, %v1717
    %v1720 = vmul.f32 %v1719, %v1718
    %v1721 = vmul.f32 0.5, %v1720
    %v1722 = vsub.f32 1.5, %v1721
    %v1723 = vmul.f32 %v1718, %v1722
    %vm1724 = vweird.f32 %v1717
    %vm1725 = vweird.f32 %v1718
    %vm1726 = vmor %vm1724, %vm1725
    %v1727 = vsel %vm1726, %v1718, %v1723
    %v1728 = vmul.f32 %v1711, %v1727
    %v1730 = vperm.slane %v1698, 0
    %v1732 = vmul.f32 %v1728, %v1730
    %v1734 = vperm.slane %v1699, 0
    %v1736 = vadd.f32 %v1732, %v1734
    %v1737 = vsel %vm178, %v1736, -inf
    %1738 = vmax.xlane.f32.xlu0 %v1737
    %v1739 = vpop.xlane.xlu0 %1738
    %v1740 = vsub.f32 %v1736, %v1739
    %v1741 = vmul.f32 %v1740, 1.442695
    %v1742 = vpow.pop %v1741
    %v1743 = vsel %vm178, %v1742, 0.0
    %1744 = vadd.xlane.f32.xlu0 %v1743
    %v1745 = vpop.xlane.xlu0 %1744
    %v1746 = vrcp.pop %v1745
    %v1747 = vmul.f32 %v1745, %v1746
    %v1748 = vsub.f32 1.0, %v1747
    %v1749 = vmul.f32 %v1746, %v1748
    %v1750 = vadd.f32 %v1746, %v1749
    %vm1751 = vweird.f32 %v1745
    %vm1752 = vweird.f32 %v1746
    %vm1753 = vmor %vm1751, %vm1752
    %v1754 = vsel %vm1753, %v1746, %v1750
    %v1755 = vand.u32 2147483647, %v1745
    %vm1756 = vcmp.eq.f32.partialorder %v1755, 8.507059e+37
    %v1757 = vand.u32 %v1745, 2147483648
    %v1758 = vor.u32 1.1754944e-38, %v1757
    %v1759 = vsel %vm1756, %v1758, %v1754
    %v1760 = vmul.f32 %v1742, %v1759
    %1762 = vrot.lane.b32.xlu0 %v1696, 124
    %v1763 = vpop.permute.xlu0 %1762
    %vm1765 = vcmask 39936
    %v1766 = vsel %vm1765, %v1763, 0.0
    %1767 = vadd.xlane.f32.xlu0 %v1766
    %v1768 = vpop.xlane.xlu0 %1767
    %v1769 = vrcp.pop 5.0
    %v1770 = vmul.f32 5.0, %v1769
    %v1771 = vsub.f32 1.0, %v1770
    %v1772 = vmul.f32 %v1769, %v1771
    %v1773 = vadd.f32 %v1769, %v1772
    %vm1774 = vweird.f32 %v1769
    %v1775 = vsel %vm1774, %v1769, %v1773
    %v1776 = vmul.f32 %v1768, %v1775
    %v1777 = vsub.f32 %v1696, %v1776
    %v1778 = vmul.f32 %v1777, %v1777
    %1780 = vrot.lane.b32.xlu0 %v1778, 124
    %v1781 = vpop.permute.xlu0 %1780
    %v1783 = vsel %vm1765, %v1781, 0.0
    %1784 = vadd.xlane.f32.xlu0 %v1783
    %v1785 = vpop.xlane.xlu0 %1784
    %v1786 = vmul.f32 %v1785, %v1775
    %v1787 = vadd.f32 %v1786, 1e-05
    %v1788 = vrsqrt.pop %v1787
    %v1789 = vmul.f32 %v1788, %v1787
    %v1790 = vmul.f32 %v1789, %v1788
    %v1791 = vmul.f32 0.5, %v1790
    %v1792 = vsub.f32 1.5, %v1791
    %v1793 = vmul.f32 %v1788, %v1792
    %vm1794 = vweird.f32 %v1787
    %vm1795 = vweird.f32 %v1788
    %vm1796 = vmor %vm1794, %vm1795
    %v1797 = vsel %vm1796, %v1788, %v1793
    %v1798 = vmul.f32 %v1777, %v1797
    %v1799 = vmul.f32 %v1798, %v1730
    %v1800 = vadd.f32 %v1799, %v1734
    %vm1801 = vcmask 72736
    %v1802 = vsel %vm1801, %v1800, -inf
    %1803 = vmax.xlane.f32.xlu0 %v1802
    %v1804 = vpop.xlane.xlu0 %1803
    %v1805 = vsub.f32 %v1800, %v1804
    %v1806 = vmul.f32 %v1805, 1.442695
    %v1807 = vpow.pop %v1806
    %1809 = vrot.lane.b32.xlu0 %v1807, 124
    %v1810 = vpop.permute.xlu0 %1809
    %v1812 = vsel %vm1765, %v1810, 0.0
    %1813 = vadd.xlane.f32.xlu0 %v1812
    %v1814 = vpop.xlane.xlu0 %1813
    %v1815 = vrcp.pop %v1814
    %v1816 = vmul.f32 %v1814, %v1815
    %v1817 = vsub.f32 1.0, %v1816
    %v1818 = vmul.f32 %v1815, %v1817
    %v1819 = vadd.f32 %v1815, %v1818
    %vm1820 = vweird.f32 %v1814
    %vm1821 = vweird.f32 %v1815
    %vm1822 = vmor %vm1820, %vm1821
    %v1823 = vsel %vm1822, %v1815, %v1819
    %v1824 = vand.u32 2147483647, %v1814
    %vm1825 = vcmp.eq.f32.partialorder %v1824, 8.507059e+37
    %v1826 = vand.u32 %v1814, 2147483648
    %v1827 = vor.u32 1.1754944e-38, %v1826
    %v1828 = vsel %vm1825, %v1827, %v1823
    %v1829 = vmul.f32 %v1807, %v1828
    %v1830 = vsel %vm178, %v1760, %v1829
    %vm1831 = vcmask 72704
    %1832 = vst.msk [vmem:[%s11] sm:$0xff] %vm1831, %v1830
    // Predicated region
    $region72: #{lstm_forward.1} parent=1 // pred_check
      _
    $region73: #{lstm_forward.1} parent=1 // pred_check_branch
      %1834 = sbr.rel (0) target = $region75
    $region74: #{lstm_forward.1} parent=1 // pred_region
      _
    $region75: #{lstm_forward.1} parent=1 // pred_fallthru
      _
    // Predicated region
    $region76: #{lstm_forward.1} parent=1 // pred_check
      _
    $region77: #{lstm_forward.1} parent=1 // pred_check_branch
      %1836 = sbr.rel (0) target = $region79
    $region78: #{lstm_forward.1} parent=1 // pred_region
      _
    $region79: #{lstm_forward.1} parent=1 // pred_fallthru
      _
    %1837 = vsyncpa [#allocation5], 1
    %1838 = vsyncpa [#allocation7], 1

</llo_original>
